<compile_context>
chip_gen: v5e
topology: v5e:2x2
jax: 0.10.0
libtpu: 0.0.40
codegen_flags: <defaults>
</compile_context>

<pallas_src>
import functools

import numpy as np
import jax
import jax.numpy as jnp
from jax import lax
from jax.experimental import pallas as pl
from jax.experimental.pallas import tpu as pltpu

_A = -0.75  # PyTorch bicubic coefficient


# ---------------------------------------------------------------------------
# Host-side glue: data-independent interpolation weights & pixel coordinates
# (equivalent to module-init / mesh construction in the PyTorch code)
# ---------------------------------------------------------------------------
def _cc1(x, a=_A):  # |x| <= 1
    return ((a + 2.0) * x - (a + 3.0)) * x * x + 1.0


def _cc2(x, a=_A):  # 1 < |x| < 2
    return ((a * x - 5.0 * a) * x + 8.0 * a) * x - 4.0 * a


def _upsample_bicubic_weights(out_size, in_size):
    """Row-interp matrix (out_size, in_size) matching torch bicubic upsample
    (align_corners=False, border indices clamped)."""
    w = np.zeros((out_size, in_size), dtype=np.float64)
    scale = in_size / out_size
    for i in range(out_size):
        src = (i + 0.5) * scale - 0.5
        idx0 = int(np.floor(src))
        t = src - idx0
        coeffs = (_cc2(t + 1.0), _cc1(t), _cc1(1.0 - t), _cc2(2.0 - t))
        for k in range(4):
            idx = min(max(idx0 - 1 + k, 0), in_size - 1)
            w[i, idx] += coeffs[k]
    return w.astype(np.float32)


def _round_up(x, m):
    return -(-x // m) * m


# ---------------------------------------------------------------------------
# Pallas kernel
# ---------------------------------------------------------------------------
def _cubic_kernel(d):
    """Keys cubic convolution kernel K(|d|), A=-0.75, support |d| < 2."""
    a = _A
    d2 = d * d
    d3 = d2 * d
    w_inner = (a + 2.0) * d3 - (a + 3.0) * d2 + 1.0           # |d| <= 1
    w_outer = a * d3 - 5.0 * a * d2 + 8.0 * a * d - 4.0 * a   # 1 < |d| < 2
    return jnp.where(d <= 1.0, w_inner, jnp.where(d < 2.0, w_outer, 0.0))


def _warp_kernel(sxp_ref, syp_ref, wy_g_ref, wx_g_ref, base_ref, phantom_ref,
                 warped_ref, six_ref, siy_ref, *, H, W):
    T = base_ref.shape[0]                       # pixels in this tile (sublanes)

    wy_g = wy_g_ref[...]                        # (T, N)  row-interp weights
    wx_g = wx_g_ref[...]                        # (T, M)  col-interp weights

    # --- 1. F.interpolate(mode='bicubic') of the shift maps, separable ------
    tx = jnp.dot(wy_g, sxp_ref[...], preferred_element_type=jnp.float32)  # (T, M)
    ty = jnp.dot(wy_g, syp_ref[...], preferred_element_type=jnp.float32)  # (T, M)
    sx = jnp.sum(tx * wx_g, axis=1, keepdims=True)                        # (T, 1)
    sy = jnp.sum(ty * wx_g, axis=1, keepdims=True)                        # (T, 1)
    six_ref[...] = sx
    siy_ref[...] = sy

    # --- 2. grid_sample coordinates (align_corners=True) --------------------
    # xf = (sx + mesh_x + 1) * 0.5 * (W-1) = 0.5*(W-1)*sx + col   (no division,
    # degenerate W==1 / H==1 handled naturally)
    base = base_ref[...]                        # (T, 2): [col, row] as f32
    col = base[:, 0:1]
    row = base[:, 1:2]
    xf = 0.5 * (W - 1) * sx + col               # (T, 1)
    yf = 0.5 * (H - 1) * sy + row               # (T, 1)

    # --- 3. two-pass separable bicubic resampling (zeros padding implicit) --
    r_idx = lax.broadcasted_iota(jnp.int32, (T, H), 1).astype(jnp.float32)
    wy_s = _cubic_kernel(jnp.abs(yf - r_idx))                             # (T, H)
    colval = jnp.dot(wy_s, phantom_ref[...],
                     preferred_element_type=jnp.float32)                  # (T, W)
    c_idx = lax.broadcasted_iota(jnp.int32, (T, W), 1).astype(jnp.float32)
    wx_s = _cubic_kernel(jnp.abs(xf - c_idx))                             # (T, W)
    warped_ref[...] = jnp.sum(wx_s * colval, axis=1, keepdims=True)       # (T, 1)


# ---------------------------------------------------------------------------
# Wrapper (Modle_A_G.forward)
# ---------------------------------------------------------------------------
def modle_a_g_forward(phantom, shift_map, phantom_size):
    """phantom: (H, W) f32; shift_map: (1, N, M, 2) f32 (trainable parameter).
    Returns (warped_Phantom (1,1,H,W), ShiftMap_interp (1,H,W,2))."""
    H, W = phantom_size
    HW = H * W
    _, N, M, _ = shift_map.shape

    # Data-independent glue (same role as module init / mesh construction).
    wy = _upsample_bicubic_weights(H, N)              # (H, N)
    wx = _upsample_bicubic_weights(W, M)              # (W, M)
    wy_g = np.repeat(wy, W, axis=0)                   # (HW, N): row p -> wy[p//W]
    wx_g = np.tile(wx, (H, 1))                        # (HW, M): row p -> wx[p%W]
    rows, cols = np.meshgrid(np.arange(H), np.arange(W), indexing="ij")
    base = np.stack([cols.reshape(-1), rows.reshape(-1)],
                    axis=1).astype(np.float32)        # (HW, 2): [col, row]

    # Tile the flattened output-pixel axis; pad to a multiple of the tile.
    if HW >= 512:
        TILE = 512
    elif HW >= 128:
        TILE = 128
    else:
        TILE = _round_up(HW, 8)
    HWp = _round_up(HW, TILE)
    pad = HWp - HW
    if pad:
        wy_g = np.pad(wy_g, ((0, pad), (0, 0)), mode="edge")
        wx_g = np.pad(wx_g, ((0, pad), (0, 0)), mode="edge")
        base = np.pad(base, ((0, pad), (0, 0)), mode="edge")

    shift_x = shift_map[0, :, :, 0].astype(jnp.float32)   # (N, M)
    shift_y = shift_map[0, :, :, 1].astype(jnp.float32)   # (N, M)
    phantom_f = phantom.astype(jnp.float32)                # (H, W)

    kernel = functools.partial(_warp_kernel, H=H, W=W)
    warped_flat, six_flat, siy_flat = pl.pallas_call(
        kernel,
        out_shape=(jax.ShapeDtypeStruct((HWp, 1), jnp.float32),
                   jax.ShapeDtypeStruct((HWp, 1), jnp.float32),
                   jax.ShapeDtypeStruct((HWp, 1), jnp.float32)),
        grid=(HWp // TILE,),
        in_specs=[pl.BlockSpec((N, M), lambda i: (0, 0)),
                  pl.BlockSpec((N, M), lambda i: (0, 0)),
                  pl.BlockSpec((TILE, N), lambda i: (i, 0)),
                  pl.BlockSpec((TILE, M), lambda i: (i, 0)),
                  pl.BlockSpec((TILE, 2), lambda i: (i, 0)),
                  pl.BlockSpec((H, W), lambda i: (0, 0))],
        out_specs=(pl.BlockSpec((TILE, 1), lambda i: (i, 0)),
                   pl.BlockSpec((TILE, 1), lambda i: (i, 0)),
                   pl.BlockSpec((TILE, 1), lambda i: (i, 0))),
        compiler_params=pltpu.CompilerParams(
            dimension_semantics=("parallel",),
            vmem_limit_bytes=32 * 1024 * 1024),
    )(shift_x, shift_y, jnp.asarray(wy_g), jnp.asarray(wx_g),
      jnp.asarray(base), phantom_f)

    warped = warped_flat[:HW, 0].reshape(1, 1, H, W)
    shift_interp = jnp.concatenate([six_flat[:HW], siy_flat[:HW]],
                                   axis=1).reshape(H, W, 2)[None]     # (1,H,W,2)
    return warped, shift_interp


# ---------------------------------------------------------------------------
if __name__ == "__main__":
    # Small shapes consistent with the module: Num_Ray=[N,M], PhantomSize=[H,W]
    N_ray, M_ray = 8, 8
    H, W = 16, 16

    key = jax.random.PRNGKey(0)
    phantom = jax.random.uniform(key, (H, W), dtype=jnp.float32)

    # Deterministic parameter init exactly as Modle_A_G.__init__:
    # ShiftMap = zeros(N, M, 2) + 1e-8, with a leading batch dim.
    shift_map = jnp.full((1, N_ray, M_ray, 2), 1e-8, dtype=jnp.float32)

    warped, shift_interp = modle_a_g_forward(phantom, shift_map, (H, W))
    warped = jax.block_until_ready(warped)
    shift_interp = jax.block_until_ready(shift_interp)

    assert warped.shape == (1, 1, H, W)
    assert shift_interp.shape == (1, H, W, 2)
    # With the ~1e-8 constant shift map, bicubic grid_sample at (almost) exact
    # grid points must reproduce the phantom (Keys kernel is interpolating).
    assert np.allclose(np.asarray(warped[0, 0]), np.asarray(phantom), atol=1e-3)
    assert np.allclose(np.asarray(shift_interp), 1e-8, atol=1e-6)

    print("KERNEL_OK")
</pallas_src>

<mosaic_0001>
module attributes {stable_mosaic.version = 11 : i64} {
  func.func @_warp_kernel(%arg0: i32, %arg1: memref<8x8xf32, #tpu.memory_space<vmem>>, %arg2: memref<8x8xf32, #tpu.memory_space<vmem>>, %arg3: memref<128x8xf32, #tpu.memory_space<vmem>>, %arg4: memref<128x8xf32, #tpu.memory_space<vmem>>, %arg5: memref<128x2xf32, #tpu.memory_space<vmem>>, %arg6: memref<16x16xf32, #tpu.memory_space<vmem>>, %arg7: memref<128x1xf32, #tpu.memory_space<vmem>>, %arg8: memref<128x1xf32, #tpu.memory_space<vmem>>, %arg9: memref<128x1xf32, #tpu.memory_space<vmem>>) attributes {dimension_semantics = [#tpu.dimension_semantics<parallel>], iteration_bounds = array<i64: 2>, scalar_prefetch = 0 : i64, scratch_operands = 0 : i64, tpu.core_type = #tpu.core_type<tc>, window_params = [{pipeline_mode = #tpu.pipeline_mode<synchronous>, transform_indices = @transform_0, window_bounds = array<i64: 8, 8>}, {pipeline_mode = #tpu.pipeline_mode<synchronous>, transform_indices = @transform_1, window_bounds = array<i64: 8, 8>}, {transform_indices = @transform_2, window_bounds = array<i64: 128, 8>}, {transform_indices = @transform_3, window_bounds = array<i64: 128, 8>}, {transform_indices = @transform_4, window_bounds = array<i64: 128, 2>}, {pipeline_mode = #tpu.pipeline_mode<synchronous>, transform_indices = @transform_5, window_bounds = array<i64: 16, 16>}, {transform_indices = @transform_6, window_bounds = array<i64: 128, 1>}, {transform_indices = @transform_7, window_bounds = array<i64: 128, 1>}, {transform_indices = @transform_8, window_bounds = array<i64: 128, 1>}]} {
    %c0 = arith.constant 0 : index
    %c0_0 = arith.constant 0 : index
    %0 = vector.load %arg3[%c0, %c0_0] : memref<128x8xf32, #tpu.memory_space<vmem>>, vector<128x8xf32>
    %c0_1 = arith.constant 0 : index
    %c0_2 = arith.constant 0 : index
    %1 = vector.load %arg4[%c0_1, %c0_2] : memref<128x8xf32, #tpu.memory_space<vmem>>, vector<128x8xf32>
    %c0_3 = arith.constant 0 : index
    %c0_4 = arith.constant 0 : index
    %2 = vector.load %arg1[%c0_3, %c0_4] : memref<8x8xf32, #tpu.memory_space<vmem>>, vector<8x8xf32>
    %cst = arith.constant dense<0.000000e+00> : vector<128x8xf32>
    %3 = tpu.matmul %0, %2, %cst {dimension_numbers = #tpu.dot_dimension_numbers<[1], [0], [0], [1], [0, 0, 1, 1], [], []>} : vector<128x8xf32>, vector<8x8xf32>, vector<128x8xf32> -> vector<128x8xf32>
    %c0_5 = arith.constant 0 : index
    %c0_6 = arith.constant 0 : index
    %4 = vector.load %arg2[%c0_5, %c0_6] : memref<8x8xf32, #tpu.memory_space<vmem>>, vector<8x8xf32>
    %cst_7 = arith.constant dense<0.000000e+00> : vector<128x8xf32>
    %5 = tpu.matmul %0, %4, %cst_7 {dimension_numbers = #tpu.dot_dimension_numbers<[1], [0], [0], [1], [0, 0, 1, 1], [], []>} : vector<128x8xf32>, vector<8x8xf32>, vector<128x8xf32> -> vector<128x8xf32>
    %6 = arith.mulf %3, %1 : vector<128x8xf32>
    %cst_8 = arith.constant dense<0.000000e+00> : vector<128xf32>
    %7 = vector.multi_reduction <add>, %6, %cst_8 [1] : vector<128x8xf32> to vector<128xf32>
    %8 = vector.shape_cast %7 : vector<128xf32> to vector<128x1xf32>
    %9 = arith.mulf %5, %1 : vector<128x8xf32>
    %cst_9 = arith.constant dense<0.000000e+00> : vector<128xf32>
    %10 = vector.multi_reduction <add>, %9, %cst_9 [1] : vector<128x8xf32> to vector<128xf32>
    %11 = vector.shape_cast %10 : vector<128xf32> to vector<128x1xf32>
    %c0_10 = arith.constant 0 : index
    %c0_11 = arith.constant 0 : index
    %12 = vector.load %arg8[%c0_10, %c0_11] : memref<128x1xf32, #tpu.memory_space<vmem>>, vector<128x1xf32>
    tpu.vector_store %arg8[%c0_10, %c0_11], %8 {strides = array<i32>} : memref<128x1xf32, #tpu.memory_space<vmem>>, vector<128x1xf32>,
    %c0_12 = arith.constant 0 : index
    %c0_13 = arith.constant 0 : index
    %13 = vector.load %arg9[%c0_12, %c0_13] : memref<128x1xf32, #tpu.memory_space<vmem>>, vector<128x1xf32>
    tpu.vector_store %arg9[%c0_12, %c0_13], %11 {strides = array<i32>} : memref<128x1xf32, #tpu.memory_space<vmem>>, vector<128x1xf32>,
    %c0_14 = arith.constant 0 : index
    %c0_15 = arith.constant 0 : index
    %14 = vector.load %arg5[%c0_14, %c0_15] : memref<128x2xf32, #tpu.memory_space<vmem>>, vector<128x2xf32>
    %15 = vector.extract_strided_slice %14 {offsets = [0, 0], sizes = [128, 1], strides = [1, 1]} : vector<128x2xf32> to vector<128x1xf32>
    %16 = vector.extract_strided_slice %14 {offsets = [0, 1], sizes = [128, 1], strides = [1, 1]} : vector<128x2xf32> to vector<128x1xf32>
    %cst_16 = arith.constant 7.500000e+00 : f32
    %17 = vector.broadcast %cst_16 : f32 to vector<128x1xf32>
    %18 = arith.mulf %17, %8 : vector<128x1xf32>
    %19 = arith.addf %18, %15 : vector<128x1xf32>
    %cst_17 = arith.constant 7.500000e+00 : f32
    %20 = vector.broadcast %cst_17 : f32 to vector<128x1xf32>
    %21 = arith.mulf %20, %11 : vector<128x1xf32>
    %22 = arith.addf %21, %16 : vector<128x1xf32>
    %23 = tpu.iota {dimensions = array<i32: 1>} : vector<128x16xi32>
    %24 = arith.sitofp %23 : vector<128x16xi32> to vector<128x16xf32>
    %25 = vector.broadcast %22 : vector<128x1xf32> to vector<128x16xf32>
    %26 = arith.subf %25, %24 : vector<128x16xf32>
    %27 = math.absf %26 : vector<128x16xf32>
    %28 = arith.mulf %27, %27 : vector<128x16xf32>
    %29 = arith.mulf %28, %27 : vector<128x16xf32>
    %cst_18 = arith.constant 1.250000e+00 : f32
    %30 = vector.broadcast %cst_18 : f32 to vector<128x16xf32>
    %31 = arith.mulf %30, %29 : vector<128x16xf32>
    %cst_19 = arith.constant 2.250000e+00 : f32
    %32 = vector.broadcast %cst_19 : f32 to vector<128x16xf32>
    %33 = arith.mulf %32, %28 : vector<128x16xf32>
    %34 = arith.subf %31, %33 : vector<128x16xf32>
    %cst_20 = arith.constant 1.000000e+00 : f32
    %35 = vector.broadcast %cst_20 : f32 to vector<128x16xf32>
    %36 = arith.addf %34, %35 : vector<128x16xf32>
    %cst_21 = arith.constant -7.500000e-01 : f32
    %37 = vector.broadcast %cst_21 : f32 to vector<128x16xf32>
    %38 = arith.mulf %37, %29 : vector<128x16xf32>
    %cst_22 = arith.constant -3.750000e+00 : f32
    %39 = vector.broadcast %cst_22 : f32 to vector<128x16xf32>
    %40 = arith.mulf %39, %28 : vector<128x16xf32>
    %41 = arith.subf %38, %40 : vector<128x16xf32>
    %cst_23 = arith.constant -6.000000e+00 : f32
    %42 = vector.broadcast %cst_23 : f32 to vector<128x16xf32>
    %43 = arith.mulf %42, %27 : vector<128x16xf32>
    %44 = arith.addf %41, %43 : vector<128x16xf32>
    %cst_24 = arith.constant -3.000000e+00 : f32
    %45 = vector.broadcast %cst_24 : f32 to vector<128x16xf32>
    %46 = arith.subf %44, %45 : vector<128x16xf32>
    %cst_25 = arith.constant 1.000000e+00 : f32
    %47 = vector.broadcast %cst_25 : f32 to vector<128x16xf32>
    %48 = arith.cmpf ole, %27, %47 : vector<128x16xf32>
    %cst_26 = arith.constant 2.000000e+00 : f32
    %49 = vector.broadcast %cst_26 : f32 to vector<128x16xf32>
    %50 = arith.cmpf olt, %27, %49 : vector<128x16xf32>
    %cst_27 = arith.constant 0.000000e+00 : f32
    %51 = vector.broadcast %cst_27 : f32 to vector<128x16xf32>
    %52 = arith.select %50, %46, %51 : vector<128x16xi1>, vector<128x16xf32>
    %53 = arith.select %48, %36, %52 : vector<128x16xi1>, vector<128x16xf32>
    %c0_28 = arith.constant 0 : index
    %c0_29 = arith.constant 0 : index
    %54 = vector.load %arg6[%c0_28, %c0_29] : memref<16x16xf32, #tpu.memory_space<vmem>>, vector<16x16xf32>
    %cst_30 = arith.constant dense<0.000000e+00> : vector<128x16xf32>
    %55 = tpu.matmul %53, %54, %cst_30 {dimension_numbers = #tpu.dot_dimension_numbers<[1], [0], [0], [1], [0, 0, 1, 1], [], []>} : vector<128x16xf32>, vector<16x16xf32>, vector<128x16xf32> -> vector<128x16xf32>
    %56 = tpu.iota {dimensions = array<i32: 1>} : vector<128x16xi32>
    %57 = arith.sitofp %56 : vector<128x16xi32> to vector<128x16xf32>
    %58 = vector.broadcast %19 : vector<128x1xf32> to vector<128x16xf32>
    %59 = arith.subf %58, %57 : vector<128x16xf32>
    %60 = math.absf %59 : vector<128x16xf32>
    %61 = arith.mulf %60, %60 : vector<128x16xf32>
    %62 = arith.mulf %61, %60 : vector<128x16xf32>
    %cst_31 = arith.constant 1.250000e+00 : f32
    %63 = vector.broadcast %cst_31 : f32 to vector<128x16xf32>
    %64 = arith.mulf %63, %62 : vector<128x16xf32>
    %cst_32 = arith.constant 2.250000e+00 : f32
    %65 = vector.broadcast %cst_32 : f32 to vector<128x16xf32>
    %66 = arith.mulf %65, %61 : vector<128x16xf32>
    %67 = arith.subf %64, %66 : vector<128x16xf32>
    %cst_33 = arith.constant 1.000000e+00 : f32
    %68 = vector.broadcast %cst_33 : f32 to vector<128x16xf32>
    %69 = arith.addf %67, %68 : vector<128x16xf32>
    %cst_34 = arith.constant -7.500000e-01 : f32
    %70 = vector.broadcast %cst_34 : f32 to vector<128x16xf32>
    %71 = arith.mulf %70, %62 : vector<128x16xf32>
    %cst_35 = arith.constant -3.750000e+00 : f32
    %72 = vector.broadcast %cst_35 : f32 to vector<128x16xf32>
    %73 = arith.mulf %72, %61 : vector<128x16xf32>
    %74 = arith.subf %71, %73 : vector<128x16xf32>
    %cst_36 = arith.constant -6.000000e+00 : f32
    %75 = vector.broadcast %cst_36 : f32 to vector<128x16xf32>
    %76 = arith.mulf %75, %60 : vector<128x16xf32>
    %77 = arith.addf %74, %76 : vector<128x16xf32>
    %cst_37 = arith.constant -3.000000e+00 : f32
    %78 = vector.broadcast %cst_37 : f32 to vector<128x16xf32>
    %79 = arith.subf %77, %78 : vector<128x16xf32>
    %cst_38 = arith.constant 1.000000e+00 : f32
    %80 = vector.broadcast %cst_38 : f32 to vector<128x16xf32>
    %81 = arith.cmpf ole, %60, %80 : vector<128x16xf32>
    %cst_39 = arith.constant 2.000000e+00 : f32
    %82 = vector.broadcast %cst_39 : f32 to vector<128x16xf32>
    %83 = arith.cmpf olt, %60, %82 : vector<128x16xf32>
    %cst_40 = arith.constant 0.000000e+00 : f32
    %84 = vector.broadcast %cst_40 : f32 to vector<128x16xf32>
    %85 = arith.select %83, %79, %84 : vector<128x16xi1>, vector<128x16xf32>
    %86 = arith.select %81, %69, %85 : vector<128x16xi1>, vector<128x16xf32>
    %87 = arith.mulf %86, %55 : vector<128x16xf32>
    %cst_41 = arith.constant dense<0.000000e+00> : vector<128xf32>
    %88 = vector.multi_reduction <add>, %87, %cst_41 [1] : vector<128x16xf32> to vector<128xf32>
    %89 = vector.shape_cast %88 : vector<128xf32> to vector<128x1xf32>
    %c0_42 = arith.constant 0 : index
    %c0_43 = arith.constant 0 : index
    %90 = vector.load %arg7[%c0_42, %c0_43] : memref<128x1xf32, #tpu.memory_space<vmem>>, vector<128x1xf32>
    tpu.vector_store %arg7[%c0_42, %c0_43], %89 {strides = array<i32>} : memref<128x1xf32, #tpu.memory_space<vmem>>, vector<128x1xf32>,
    return
  }
  func.func @transform_0(%arg0: i32) -> (i32, i32) {
    %c0_i32 = arith.constant 0 : i32
    %c0_i32_0 = arith.constant 0 : i32
    %c0_i32_1 = arith.constant 0 : i32
    return %c0_i32, %c0_i32_0 : i32, i32
  }
  func.func @transform_1(%arg0: i32) -> (i32, i32) {
    %c0_i32 = arith.constant 0 : i32
    %c0_i32_0 = arith.constant 0 : i32
    %c0_i32_1 = arith.constant 0 : i32
    return %c0_i32, %c0_i32_0 : i32, i32
  }
  func.func @transform_2(%arg0: i32) -> (i32, i32) {
    %c0_i32 = arith.constant 0 : i32
    %c0_i32_0 = arith.constant 0 : i32
    return %arg0, %c0_i32 : i32, i32
  }
  func.func @transform_3(%arg0: i32) -> (i32, i32) {
    %c0_i32 = arith.constant 0 : i32
    %c0_i32_0 = arith.constant 0 : i32
    return %arg0, %c0_i32 : i32, i32
  }
  func.func @transform_4(%arg0: i32) -> (i32, i32) {
    %c0_i32 = arith.constant 0 : i32
    %c0_i32_0 = arith.constant 0 : i32
    return %arg0, %c0_i32 : i32, i32
  }
  func.func @transform_5(%arg0: i32) -> (i32, i32) {
    %c0_i32 = arith.constant 0 : i32
    %c0_i32_0 = arith.constant 0 : i32
    %c0_i32_1 = arith.constant 0 : i32
    return %c0_i32, %c0_i32_0 : i32, i32
  }
  func.func @transform_6(%arg0: i32) -> (i32, i32) {
    %c0_i32 = arith.constant 0 : i32
    %c0_i32_0 = arith.constant 0 : i32
    return %arg0, %c0_i32 : i32, i32
  }
  func.func @transform_7(%arg0: i32) -> (i32, i32) {
    %c0_i32 = arith.constant 0 : i32
    %c0_i32_0 = arith.constant 0 : i32
    return %arg0, %c0_i32 : i32, i32
  }
  func.func @transform_8(%arg0: i32) -> (i32, i32) {
    %c0_i32 = arith.constant 0 : i32
    %c0_i32_0 = arith.constant 0 : i32
    return %arg0, %c0_i32 : i32, i32
  }
}

</mosaic_0001>

<llo_original>
// kernel: tpu_custom_call.1
$region0: #{tpu_custom_call.1}
  #allocation0 [shape = 'u32[]', space=smem, size = 0x4, offset = 0x4, fixed_abs, tag = 'smem constant byte address 0x4 - core index']
  #allocation1 [shape = 'u32[72,128]{1,0:T(1,128)}', space=vmem, size = 0x9000, scoped, tag = 'internal scratch']
  %s0 = inlined_call_operand.vmem [shape: f32[8,8], index: 0, kind: input, shape index: {}]
  %s1 = inlined_call_operand.vmem [shape: f32[8,8], index: 1, kind: input, shape index: {}]
  %s2 = inlined_call_operand.vmem [shape: f32[256,8], index: 2, kind: input, shape index: {}]
  %s3 = inlined_call_operand.vmem [shape: f32[256,8], index: 3, kind: input, shape index: {}]
  %s4 = inlined_call_operand.vmem [shape: f32[256,2], index: 4, kind: input, shape index: {}]
  %s5 = inlined_call_operand.vmem [shape: f32[16,16], index: 5, kind: input, shape index: {}]
  %s6 = inlined_call_operand.vmem [shape: f32[256,1], index: 6, kind: output, shape index: {0}]
  %s7 = inlined_call_operand.vmem [shape: f32[256,1], index: 7, kind: output, shape index: {1}]
  %s8 = inlined_call_operand.vmem [shape: f32[256,1], index: 8, kind: output, shape index: {2}]
  %9 = xla_tuple %s6, %s7, %s8
  %s10 = sld [smem:[#allocation0]]
  $region73: #{tpu_custom_call.1} parent=0
    _
  %s12 = ssub.s32 1, %s10
  %s13 = scalar_select 0, %s12, %s10
  loop: start=0, step=1, limit=4
  $region2: #{tpu_custom_call.1} parent=0 // loop_pre_header
    _
  $region3: #{tpu_custom_call.1} parent=0 // loop_header
    %s15 = sphi 0, %s19
    %p16 = scmp.ge.s32.totalorder %s15, 4
    %s23 = sphi 0, %s23
    %s25 = sphi 0, %s23
    %s26 = sphi 0, %s25
    %s40 = sphi 0, %s26
    %s44 = sphi 0, %s44
    %s46 = sphi 0, %s44
    %s47 = sphi 0, %s46
    %s61 = sphi 0, %s47
    %s67 = sphi 0, %s69
    %s70 = sphi 0, %s67
    %s71 = sphi 0, %s70
    %s87 = sphi 0, %s71
    %s93 = sphi 0, %s95
    %s96 = sphi 0, %s93
    %s97 = sphi 0, %s96
    %s113 = sphi 0, %s97
    %s119 = sphi 0, %s121
    %s122 = sphi 0, %s119
    %s123 = sphi 0, %s122
    %s139 = sphi 0, %s123
    %s143 = sphi 0, %s143
    %s145 = sphi 0, %s143
    %s146 = sphi 0, %s145
    %s160 = sphi 0, %s146
    %s166 = sphi 0, %s168
    %s169 = sphi 0, %s166
    %s170 = sphi 0, %s169
    %s186 = sphi 0, %s170
    %s192 = sphi 0, %s194
    %s195 = sphi 0, %s192
    %s196 = sphi 0, %s195
    %s212 = sphi 0, %s196
    %s218 = sphi 0, %s220
    %s221 = sphi 0, %s218
    %s222 = sphi 0, %s221
    %s238 = sphi 0, %s222
  $region4: #{tpu_custom_call.1} parent=0 // loop_header_branch
    %18 = sbr.rel (%p16) target = $region8
  $region5: #{tpu_custom_call.1} parent=0 // loop_body
    %s20 = ssub.s32 %s15, 1
    %s21 = ssub.s32 %s15, 2
    %s22 = sadd.s32 %s15, 1
    %s24 = sadd.s32 %s23, 1
    %p27 = scmp.eq.s32.totalorder %s15, 1
    %p28 = scmp.ne.s32.totalorder %s23, %s25
    %p29 = scmp.eq.s32.totalorder %s15, 0
    %p30 = por %p28, %p29
    %p31 = scmp.ne.s32.totalorder %s23, %s25
    %p32 = scmp.eq.s32.totalorder %s20, 1
    %p33 = por %p31, %p32
    %p34 = scmp.ne.s32.totalorder %s25, %s26
    %p35 = scmp.eq.s32.totalorder %s20, 0
    %p36 = por %p34, %p35
    %p37 = scmp.ne.s32.totalorder %s25, %s26
    %p38 = scmp.eq.s32.totalorder %s21, 1
    %p39 = por %p37, %p38
    %p41 = scmp.ne.s32.totalorder %s26, %s40
    %p42 = scmp.eq.s32.totalorder %s21, 0
    %p43 = por %p41, %p42
    %s45 = sadd.s32 %s44, 1
    %p48 = scmp.eq.s32.totalorder %s15, 1
    %p49 = scmp.ne.s32.totalorder %s44, %s46
    %p50 = scmp.eq.s32.totalorder %s15, 0
    %p51 = por %p49, %p50
    %p52 = scmp.ne.s32.totalorder %s44, %s46
    %p53 = scmp.eq.s32.totalorder %s20, 1
    %p54 = por %p52, %p53
    %p55 = scmp.ne.s32.totalorder %s46, %s47
    %p56 = scmp.eq.s32.totalorder %s20, 0
    %p57 = por %p55, %p56
    %p58 = scmp.ne.s32.totalorder %s46, %s47
    %p59 = scmp.eq.s32.totalorder %s21, 1
    %p60 = por %p58, %p59
    %p62 = scmp.ne.s32.totalorder %s47, %s61
    %p63 = scmp.eq.s32.totalorder %s21, 0
    %p64 = por %p62, %p63
    %s65 = ssub.s32 %s15, %s22
    %p66 = scmp.eq.s32.totalorder %s65, 0
    %s68 = sadd.s32 %s67, 1
    %s69 = scalar_select %p66, %s67, %s68
    %p72 = pneg %p66
    %p73 = scmp.eq.s32.totalorder %s15, 1
    %p74 = por %p72, %p73
    %p75 = scmp.ne.s32.totalorder %s67, %s70
    %p76 = scmp.eq.s32.totalorder %s15, 0
    %p77 = por %p75, %p76
    %p78 = scmp.ne.s32.totalorder %s67, %s70
    %p79 = scmp.eq.s32.totalorder %s20, 1
    %p80 = por %p78, %p79
    %p81 = scmp.ne.s32.totalorder %s70, %s71
    %p82 = scmp.eq.s32.totalorder %s20, 0
    %p83 = por %p81, %p82
    %p84 = scmp.ne.s32.totalorder %s70, %s71
    %p85 = scmp.eq.s32.totalorder %s21, 1
    %p86 = por %p84, %p85
    %p88 = scmp.ne.s32.totalorder %s71, %s87
    %p89 = scmp.eq.s32.totalorder %s21, 0
    %p90 = por %p88, %p89
    %s91 = ssub.s32 %s15, %s22
    %p92 = scmp.eq.s32.totalorder %s91, 0
    %s94 = sadd.s32 %s93, 1
    %s95 = scalar_select %p92, %s93, %s94
    %p98 = pneg %p92
    %p99 = scmp.eq.s32.totalorder %s15, 1
    %p100 = por %p98, %p99
    %p101 = scmp.ne.s32.totalorder %s93, %s96
    %p102 = scmp.eq.s32.totalorder %s15, 0
    %p103 = por %p101, %p102
    %p104 = scmp.ne.s32.totalorder %s93, %s96
    %p105 = scmp.eq.s32.totalorder %s20, 1
    %p106 = por %p104, %p105
    %p107 = scmp.ne.s32.totalorder %s96, %s97
    %p108 = scmp.eq.s32.totalorder %s20, 0
    %p109 = por %p107, %p108
    %p110 = scmp.ne.s32.totalorder %s96, %s97
    %p111 = scmp.eq.s32.totalorder %s21, 1
    %p112 = por %p110, %p111
    %p114 = scmp.ne.s32.totalorder %s97, %s113
    %p115 = scmp.eq.s32.totalorder %s21, 0
    %p116 = por %p114, %p115
    %s117 = ssub.s32 %s15, %s22
    %p118 = scmp.eq.s32.totalorder %s117, 0
    %s120 = sadd.s32 %s119, 1
    %s121 = scalar_select %p118, %s119, %s120
    %p124 = pneg %p118
    %p125 = scmp.eq.s32.totalorder %s15, 1
    %p126 = por %p124, %p125
    %p127 = scmp.ne.s32.totalorder %s119, %s122
    %p128 = scmp.eq.s32.totalorder %s15, 0
    %p129 = por %p127, %p128
    %p130 = scmp.ne.s32.totalorder %s119, %s122
    %p131 = scmp.eq.s32.totalorder %s20, 1
    %p132 = por %p130, %p131
    %p133 = scmp.ne.s32.totalorder %s122, %s123
    %p134 = scmp.eq.s32.totalorder %s20, 0
    %p135 = por %p133, %p134
    %p136 = scmp.ne.s32.totalorder %s122, %s123
    %p137 = scmp.eq.s32.totalorder %s21, 1
    %p138 = por %p136, %p137
    %p140 = scmp.ne.s32.totalorder %s123, %s139
    %p141 = scmp.eq.s32.totalorder %s21, 0
    %p142 = por %p140, %p141
    %s144 = sadd.s32 %s143, 1
    %p147 = scmp.eq.s32.totalorder %s15, 1
    %p148 = scmp.ne.s32.totalorder %s143, %s145
    %p149 = scmp.eq.s32.totalorder %s15, 0
    %p150 = por %p148, %p149
    %p151 = scmp.ne.s32.totalorder %s143, %s145
    %p152 = scmp.eq.s32.totalorder %s20, 1
    %p153 = por %p151, %p152
    %p154 = scmp.ne.s32.totalorder %s145, %s146
    %p155 = scmp.eq.s32.totalorder %s20, 0
    %p156 = por %p154, %p155
    %p157 = scmp.ne.s32.totalorder %s145, %s146
    %p158 = scmp.eq.s32.totalorder %s21, 1
    %p159 = por %p157, %p158
    %p161 = scmp.ne.s32.totalorder %s146, %s160
    %p162 = scmp.eq.s32.totalorder %s21, 0
    %p163 = por %p161, %p162
    %s164 = ssub.s32 %s15, %s22
    %p165 = scmp.eq.s32.totalorder %s164, 0
    %s167 = sadd.s32 %s166, 1
    %s168 = scalar_select %p165, %s166, %s167
    %p171 = pneg %p165
    %p172 = scmp.eq.s32.totalorder %s15, 1
    %p173 = por %p171, %p172
    %p174 = scmp.ne.s32.totalorder %s166, %s169
    %p175 = scmp.eq.s32.totalorder %s15, 0
    %p176 = por %p174, %p175
    %p177 = scmp.ne.s32.totalorder %s166, %s169
    %p178 = scmp.eq.s32.totalorder %s20, 1
    %p179 = por %p177, %p178
    %p180 = scmp.ne.s32.totalorder %s169, %s170
    %p181 = scmp.eq.s32.totalorder %s20, 0
    %p182 = por %p180, %p181
    %p183 = scmp.ne.s32.totalorder %s169, %s170
    %p184 = scmp.eq.s32.totalorder %s21, 1
    %p185 = por %p183, %p184
    %p187 = scmp.ne.s32.totalorder %s170, %s186
    %p188 = scmp.eq.s32.totalorder %s21, 0
    %p189 = por %p187, %p188
    %s190 = ssub.s32 %s15, %s22
    %p191 = scmp.eq.s32.totalorder %s190, 0
    %s193 = sadd.s32 %s192, 1
    %s194 = scalar_select %p191, %s192, %s193
    %p197 = pneg %p191
    %p198 = scmp.eq.s32.totalorder %s15, 1
    %p199 = por %p197, %p198
    %p200 = scmp.ne.s32.totalorder %s192, %s195
    %p201 = scmp.eq.s32.totalorder %s15, 0
    %p202 = por %p200, %p201
    %p203 = scmp.ne.s32.totalorder %s192, %s195
    %p204 = scmp.eq.s32.totalorder %s20, 1
    %p205 = por %p203, %p204
    %p206 = scmp.ne.s32.totalorder %s195, %s196
    %p207 = scmp.eq.s32.totalorder %s20, 0
    %p208 = por %p206, %p207
    %p209 = scmp.ne.s32.totalorder %s195, %s196
    %p210 = scmp.eq.s32.totalorder %s21, 1
    %p211 = por %p209, %p210
    %p213 = scmp.ne.s32.totalorder %s196, %s212
    %p214 = scmp.eq.s32.totalorder %s21, 0
    %p215 = por %p213, %p214
    %s216 = ssub.s32 %s15, %s22
    %p217 = scmp.eq.s32.totalorder %s216, 0
    %s219 = sadd.s32 %s218, 1
    %s220 = scalar_select %p217, %s218, %s219
    %p223 = pneg %p217
    %p224 = scmp.eq.s32.totalorder %s15, 1
    %p225 = por %p223, %p224
    %p226 = scmp.ne.s32.totalorder %s218, %s221
    %p227 = scmp.eq.s32.totalorder %s15, 0
    %p228 = por %p226, %p227
    %p229 = scmp.ne.s32.totalorder %s218, %s221
    %p230 = scmp.eq.s32.totalorder %s20, 1
    %p231 = por %p229, %p230
    %p232 = scmp.ne.s32.totalorder %s221, %s222
    %p233 = scmp.eq.s32.totalorder %s20, 0
    %p234 = por %p232, %p233
    %p235 = scmp.ne.s32.totalorder %s221, %s222
    %p236 = scmp.eq.s32.totalorder %s21, 1
    %p237 = por %p235, %p236
    %p239 = scmp.ne.s32.totalorder %s222, %s238
    %p240 = scmp.eq.s32.totalorder %s21, 0
    %p241 = por %p239, %p240
    %p242 = scmp.le.s32.totalorder 1, %s15
    %p243 = scmp.lt.s32.totalorder %s15, 3
    %p244 = pnand %p242, %p243
    %p245 = pneg %p244
    // Predicated region
    $region9: #{tpu_custom_call.1} parent=5 // pred_check
      _
    $region10: #{tpu_custom_call.1} parent=5 // pred_check_branch
      %247 = sbr.rel (%p244) target = $region12
    $region11: #{tpu_custom_call.1} parent=5 // pred_region
      %s248 = ssub.s32 %s15, 1
      // Predicated region
      $region13: #{tpu_custom_call.1} parent=11 // pred_check
        %p249 = pneg %p36
      $region14: #{tpu_custom_call.1} parent=11 // pred_check_branch
        %251 = sbr.rel (%p249) target = $region16
      $region15: #{tpu_custom_call.1} parent=11 // pred_region
        _
      $region16: #{tpu_custom_call.1} parent=11 // pred_fallthru
        _
      // Predicated region
      $region17: #{tpu_custom_call.1} parent=11 // pred_check
        %p252 = pneg %p57
      $region18: #{tpu_custom_call.1} parent=11 // pred_check_branch
        %254 = sbr.rel (%p252) target = $region20
      $region19: #{tpu_custom_call.1} parent=11 // pred_region
        _
      $region20: #{tpu_custom_call.1} parent=11 // pred_fallthru
        _
      // Predicated region
      $region21: #{tpu_custom_call.1} parent=11 // pred_check
        %p255 = pneg %p156
      $region22: #{tpu_custom_call.1} parent=11 // pred_check_branch
        %257 = sbr.rel (%p255) target = $region24
      $region23: #{tpu_custom_call.1} parent=11 // pred_region
        _
      $region24: #{tpu_custom_call.1} parent=11 // pred_fallthru
        _
    $region12: #{tpu_custom_call.1} parent=5 // pred_fallthru
      _
    %p258 = scmp.lt.s32.totalorder %s15, 2
    // Predicated region
    $region25: #{tpu_custom_call.1} parent=5 // pred_check
      %p259 = pneg %p258
    $region26: #{tpu_custom_call.1} parent=5 // pred_check_branch
      %261 = sbr.rel (%p259) target = $region28
    $region27: #{tpu_custom_call.1} parent=5 // pred_region
      // Predicated region
      $region29: #{tpu_custom_call.1} parent=27 // pred_check
        %p262 = pneg %p77
      $region30: #{tpu_custom_call.1} parent=27 // pred_check_branch
        %264 = sbr.rel (%p262) target = $region32
      $region31: #{tpu_custom_call.1} parent=27 // pred_region
        %s265 = smul.u32 16, %s15
        %p266 = scmp.lt.s32.totalorder %s265, 31
        %s267 = scalar_select %p266, %s265, 31
        %s268 = smul.addr %s267, 8
        %s269 = scalar_lea.vmem %s2, %s268
        %s270 = smul.u32 16, %s15
      $region32: #{tpu_custom_call.1} parent=27 // pred_fallthru
        _
      // Predicated region
      $region33: #{tpu_custom_call.1} parent=27 // pred_check
        %p271 = pneg %p103
      $region34: #{tpu_custom_call.1} parent=27 // pred_check_branch
        %273 = sbr.rel (%p271) target = $region36
      $region35: #{tpu_custom_call.1} parent=27 // pred_region
        %s274 = smul.u32 16, %s15
        %p275 = scmp.lt.s32.totalorder %s274, 31
        %s276 = scalar_select %p275, %s274, 31
        %s277 = smul.addr %s276, 8
        %s278 = scalar_lea.vmem %s3, %s277
        %s279 = smul.u32 16, %s15
      $region36: #{tpu_custom_call.1} parent=27 // pred_fallthru
        _
      // Predicated region
      $region37: #{tpu_custom_call.1} parent=27 // pred_check
        %p280 = pneg %p129
      $region38: #{tpu_custom_call.1} parent=27 // pred_check_branch
        %282 = sbr.rel (%p280) target = $region40
      $region39: #{tpu_custom_call.1} parent=27 // pred_region
        %s283 = smul.u32 16, %s15
        %p284 = scmp.lt.s32.totalorder %s283, 31
        %s285 = scalar_select %p284, %s283, 31
        %s286 = smul.addr %s285, 8
        %s287 = scalar_lea.vmem %s4, %s286
        %s288 = smul.u32 16, %s15
      $region40: #{tpu_custom_call.1} parent=27 // pred_fallthru
        _
    $region28: #{tpu_custom_call.1} parent=5 // pred_fallthru
      _
    %p289 = scmp.le.s32.totalorder 1, %s15
    %p290 = scmp.lt.s32.totalorder %s15, 3
    %p291 = pnand %p289, %p290
    %p292 = pneg %p291
    // Predicated region
    $region41: #{tpu_custom_call.1} parent=5 // pred_check
      _
    $region42: #{tpu_custom_call.1} parent=5 // pred_check_branch
      %294 = sbr.rel (%p291) target = $region44
    $region43: #{tpu_custom_call.1} parent=5 // pred_region
      %s295 = ssub.s32 %s15, 1
      %p296 = pneg %p36
      %p297 = pneg %p33
      %p298 = pneg %p57
      %p299 = pneg %p54
      %s300 = smul.u32 16, %s20
      %p301 = scmp.lt.s32.totalorder %s300, 31
      %s302 = scalar_select %p301, %s300, 31
      %s303 = smul.addr %s302, 8
      %s304 = scalar_lea.vmem %s2, %s303
      %p305 = pneg %p83
      %p306 = pneg %p80
      %s307 = smul.u32 16, %s20
      %p308 = scmp.lt.s32.totalorder %s307, 31
      %s309 = scalar_select %p308, %s307, 31
      %s310 = smul.addr %s309, 8
      %s311 = scalar_lea.vmem %s3, %s310
      %p312 = pneg %p109
      %p313 = pneg %p106
      %s314 = smul.u32 16, %s20
      %p315 = scmp.lt.s32.totalorder %s314, 31
      %s316 = scalar_select %p315, %s314, 31
      %s317 = smul.addr %s316, 8
      %s318 = scalar_lea.vmem %s4, %s317
      %p319 = pneg %p135
      %p320 = pneg %p132
      %p321 = pneg %p156
      %p322 = pneg %p153
      %p323 = pneg %p182
      %p324 = pneg %p179
      %s325 = smul.u32 16, %s20
      %p326 = scmp.lt.s32.totalorder %s325, 31
      %s327 = scalar_select %p326, %s325, 31
      %s328 = smul.addr %s327, 8
      %s329 = scalar_lea.vmem %s6, %s328
      %p330 = pneg %p208
      %p331 = pneg %p205
      %s332 = smul.u32 16, %s20
      %p333 = scmp.lt.s32.totalorder %s332, 31
      %s334 = scalar_select %p333, %s332, 31
      %s335 = smul.addr %s334, 8
      %s336 = scalar_lea.vmem %s7, %s335
      %p337 = pneg %p234
      %p338 = pneg %p231
      %s339 = smul.u32 16, %s20
      %p340 = scmp.lt.s32.totalorder %s339, 31
      %s341 = scalar_select %p340, %s339, 31
      %s342 = smul.addr %s341, 8
      %s343 = scalar_lea.vmem %s8, %s342
      %s344 = smul.u32 16, %s20
      %p345 = scmp.lt.s32.totalorder %s344, 31
      %s346 = scalar_select %p345, %s344, 31
      %s347 = smul.addr %s346, 8
      %s348 = scalar_lea.vmem %s2, %s347
      %s349 = smul.u32 16, %s20
      %s350 = smul.u32 16, %s20
      %p351 = scmp.lt.s32.totalorder %s350, 31
      %s352 = scalar_select %p351, %s350, 31
      %s353 = smul.addr %s352, 8
      %s354 = scalar_lea.vmem %s3, %s353
      %s355 = smul.u32 16, %s20
      %s356 = smul.u32 16, %s20
      %p357 = scmp.lt.s32.totalorder %s356, 31
      %s358 = scalar_select %p357, %s356, 31
      %s359 = smul.addr %s358, 8
      %s360 = scalar_lea.vmem %s4, %s359
      %s361 = smul.u32 16, %s20
      %s362 = smul.u32 16, %s20
      %p363 = scmp.lt.s32.totalorder %s362, 31
      %s364 = scalar_select %p363, %s362, 31
      %s365 = smul.addr %s364, 8
      %s366 = scalar_lea.vmem %s6, %s365
      %s367 = smul.u32 16, %s20
      %s368 = smul.u32 16, %s20
      %p369 = scmp.lt.s32.totalorder %s368, 31
      %s370 = scalar_select %p369, %s368, 31
      %s371 = smul.addr %s370, 8
      %s372 = scalar_lea.vmem %s7, %s371
      %s373 = smul.u32 16, %s20
      %s374 = smul.u32 16, %s20
      %p375 = scmp.lt.s32.totalorder %s374, 31
      %s376 = scalar_select %p375, %s374, 31
      %s377 = smul.addr %s376, 8
      %s378 = scalar_lea.vmem %s8, %s377
      %s379 = smul.u32 16, %s20
      %v380 = vld [vmem:[%s348] sm:$0xff]
      %v381 = vld [vmem:[%s348 + $0x8] sm:$0xff]
      %v382 = vld [vmem:[%s348 + $0x10] sm:$0xff]
      %v383 = vld [vmem:[%s348 + $0x18] sm:$0xff]
      %v384 = vld [vmem:[%s348 + $0x20] sm:$0xff]
      %v385 = vld [vmem:[%s348 + $0x28] sm:$0xff]
      %v386 = vld [vmem:[%s348 + $0x30] sm:$0xff]
      %v387 = vld [vmem:[%s348 + $0x38] sm:$0xff]
      %v388 = vld [vmem:[%s348 + $0x40] sm:$0xff]
      %v389 = vld [vmem:[%s348 + $0x48] sm:$0xff]
      %v390 = vld [vmem:[%s348 + $0x50] sm:$0xff]
      %v391 = vld [vmem:[%s348 + $0x58] sm:$0xff]
      %v392 = vld [vmem:[%s348 + $0x60] sm:$0xff]
      %v393 = vld [vmem:[%s348 + $0x68] sm:$0xff]
      %v394 = vld [vmem:[%s348 + $0x70] sm:$0xff]
      %v395 = vld [vmem:[%s348 + $0x78] sm:$0xff]
      %v396 = vld [vmem:[%s354] sm:$0xff]
      %v397 = vld [vmem:[%s354 + $0x8] sm:$0xff]
      %v398 = vld [vmem:[%s354 + $0x10] sm:$0xff]
      %v399 = vld [vmem:[%s354 + $0x18] sm:$0xff]
      %v400 = vld [vmem:[%s354 + $0x20] sm:$0xff]
      %v401 = vld [vmem:[%s354 + $0x28] sm:$0xff]
      %v402 = vld [vmem:[%s354 + $0x30] sm:$0xff]
      %v403 = vld [vmem:[%s354 + $0x38] sm:$0xff]
      %v404 = vld [vmem:[%s354 + $0x40] sm:$0xff]
      %v405 = vld [vmem:[%s354 + $0x48] sm:$0xff]
      %v406 = vld [vmem:[%s354 + $0x50] sm:$0xff]
      %v407 = vld [vmem:[%s354 + $0x58] sm:$0xff]
      %v408 = vld [vmem:[%s354 + $0x60] sm:$0xff]
      %v409 = vld [vmem:[%s354 + $0x68] sm:$0xff]
      %v410 = vld [vmem:[%s354 + $0x70] sm:$0xff]
      %v411 = vld [vmem:[%s354 + $0x78] sm:$0xff]
      %v412 = vld [vmem:[%s0] sm:$0xff]
      %vm413 = vcmask 64512
      %v415 = vsel %vm413, %v380, 0
      %v418 = vsel %vm413, %v381, 0
      %v421 = vsel %vm413, %v382, 0
      %v424 = vsel %vm413, %v383, 0
      %v427 = vsel %vm413, %v384, 0
      %v430 = vsel %vm413, %v385, 0
      %v433 = vsel %vm413, %v386, 0
      %v436 = vsel %vm413, %v387, 0
      %v439 = vsel %vm413, %v388, 0
      %v442 = vsel %vm413, %v389, 0
      %v445 = vsel %vm413, %v390, 0
      %v448 = vsel %vm413, %v391, 0
      %v451 = vsel %vm413, %v392, 0
      %v454 = vsel %vm413, %v393, 0
      %v457 = vsel %vm413, %v394, 0
      %v460 = vsel %vm413, %v395, 0
      %462 = vmatpush.msra.mxu0 0.0
      %463 = vmatpush.msra.mxu0 0.0
      %464 = vmatpush.msra.mxu0 0.0
      %465 = vmatpush.msra.mxu0 0.0
      %466 = vmatpush.msra.mxu0 0.0
      %467 = vmatpush.msra.mxu0 0.0
      %468 = vmatpush.msra.mxu0 0.0
      %469 = vmatpush.msra.mxu0 0.0
      %470 = vmatpush.msra.mxu0 0.0
      %471 = vmatpush.msra.mxu0 0.0
      %472 = vmatpush.msra.mxu0 0.0
      %473 = vmatpush.msra.mxu0 0.0
      %474 = vmatpush.msra.mxu0 0.0
      %475 = vmatpush.msra.mxu0 0.0
      %476 = vmatpush.msra.mxu0 0.0
      %477 = vmatpush.msra.mxu0 %v412
      %478 = vmatmul.f32.gmra.mxu0 %v415
      %v479 = vpop.f32.mrf.mxu0
      %v480 = vadd.f32 0.0, %v479
      %481 = vmatmul.f32.gmra.mxu0 %v418
      %v482 = vpop.f32.mrf.mxu0
      %v483 = vadd.f32 0.0, %v482
      %484 = vmatmul.f32.gmra.mxu0 %v421
      %v485 = vpop.f32.mrf.mxu0
      %v486 = vadd.f32 0.0, %v485
      %487 = vmatmul.f32.gmra.mxu0 %v424
      %v488 = vpop.f32.mrf.mxu0
      %v489 = vadd.f32 0.0, %v488
      %490 = vmatmul.f32.gmra.mxu0 %v427
      %v491 = vpop.f32.mrf.mxu0
      %v492 = vadd.f32 0.0, %v491
      %493 = vmatmul.f32.gmra.mxu0 %v430
      %v494 = vpop.f32.mrf.mxu0
      %v495 = vadd.f32 0.0, %v494
      %496 = vmatmul.f32.gmra.mxu0 %v433
      %v497 = vpop.f32.mrf.mxu0
      %v498 = vadd.f32 0.0, %v497
      %499 = vmatmul.f32.gmra.mxu0 %v436
      %v500 = vpop.f32.mrf.mxu0
      %v501 = vadd.f32 0.0, %v500
      %502 = vmatmul.f32.gmra.mxu0 %v439
      %v503 = vpop.f32.mrf.mxu0
      %v504 = vadd.f32 0.0, %v503
      %505 = vmatmul.f32.gmra.mxu0 %v442
      %v506 = vpop.f32.mrf.mxu0
      %v507 = vadd.f32 0.0, %v506
      %508 = vmatmul.f32.gmra.mxu0 %v445
      %v509 = vpop.f32.mrf.mxu0
      %v510 = vadd.f32 0.0, %v509
      %511 = vmatmul.f32.gmra.mxu0 %v448
      %v512 = vpop.f32.mrf.mxu0
      %v513 = vadd.f32 0.0, %v512
      %514 = vmatmul.f32.gmra.mxu0 %v451
      %v515 = vpop.f32.mrf.mxu0
      %v516 = vadd.f32 0.0, %v515
      %517 = vmatmul.f32.gmra.mxu0 %v454
      %v518 = vpop.f32.mrf.mxu0
      %v519 = vadd.f32 0.0, %v518
      %520 = vmatmul.f32.gmra.mxu0 %v457
      %v521 = vpop.f32.mrf.mxu0
      %v522 = vadd.f32 0.0, %v521
      %523 = vmatmul.f32.gmra.mxu0 %v460
      %v524 = vpop.f32.mrf.mxu0
      %v525 = vadd.f32 0.0, %v524
      %526 = vdwg.mxu0
      %v527 = vld [vmem:[%s1] sm:$0xff]
      %528 = vmatpush.msra.mxu0 0.0
      %529 = vmatpush.msra.mxu0 0.0
      %530 = vmatpush.msra.mxu0 0.0
      %531 = vmatpush.msra.mxu0 0.0
      %532 = vmatpush.msra.mxu0 0.0
      %533 = vmatpush.msra.mxu0 0.0
      %534 = vmatpush.msra.mxu0 0.0
      %535 = vmatpush.msra.mxu0 0.0
      %536 = vmatpush.msra.mxu0 0.0
      %537 = vmatpush.msra.mxu0 0.0
      %538 = vmatpush.msra.mxu0 0.0
      %539 = vmatpush.msra.mxu0 0.0
      %540 = vmatpush.msra.mxu0 0.0
      %541 = vmatpush.msra.mxu0 0.0
      %542 = vmatpush.msra.mxu0 0.0
      %543 = vmatpush.msra.mxu0 %v527
      %544 = vmatmul.f32.gmra.mxu0 %v415
      %v545 = vpop.f32.mrf.mxu0
      %v546 = vadd.f32 0.0, %v545
      %547 = vmatmul.f32.gmra.mxu0 %v418
      %v548 = vpop.f32.mrf.mxu0
      %v549 = vadd.f32 0.0, %v548
      %550 = vmatmul.f32.gmra.mxu0 %v421
      %v551 = vpop.f32.mrf.mxu0
      %v552 = vadd.f32 0.0, %v551
      %553 = vmatmul.f32.gmra.mxu0 %v424
      %v554 = vpop.f32.mrf.mxu0
      %v555 = vadd.f32 0.0, %v554
      %556 = vmatmul.f32.gmra.mxu0 %v427
      %v557 = vpop.f32.mrf.mxu0
      %v558 = vadd.f32 0.0, %v557
      %559 = vmatmul.f32.gmra.mxu0 %v430
      %v560 = vpop.f32.mrf.mxu0
      %v561 = vadd.f32 0.0, %v560
      %562 = vmatmul.f32.gmra.mxu0 %v433
      %v563 = vpop.f32.mrf.mxu0
      %v564 = vadd.f32 0.0, %v563
      %565 = vmatmul.f32.gmra.mxu0 %v436
      %v566 = vpop.f32.mrf.mxu0
      %v567 = vadd.f32 0.0, %v566
      %568 = vmatmul.f32.gmra.mxu0 %v439
      %v569 = vpop.f32.mrf.mxu0
      %v570 = vadd.f32 0.0, %v569
      %571 = vmatmul.f32.gmra.mxu0 %v442
      %v572 = vpop.f32.mrf.mxu0
      %v573 = vadd.f32 0.0, %v572
      %574 = vmatmul.f32.gmra.mxu0 %v445
      %v575 = vpop.f32.mrf.mxu0
      %v576 = vadd.f32 0.0, %v575
      %577 = vmatmul.f32.gmra.mxu0 %v448
      %v578 = vpop.f32.mrf.mxu0
      %v579 = vadd.f32 0.0, %v578
      %580 = vmatmul.f32.gmra.mxu0 %v451
      %v581 = vpop.f32.mrf.mxu0
      %v582 = vadd.f32 0.0, %v581
      %583 = vmatmul.f32.gmra.mxu0 %v454
      %v584 = vpop.f32.mrf.mxu0
      %v585 = vadd.f32 0.0, %v584
      %586 = vmatmul.f32.gmra.mxu0 %v457
      %v587 = vpop.f32.mrf.mxu0
      %v588 = vadd.f32 0.0, %v587
      %589 = vmatmul.f32.gmra.mxu0 %v460
      %v590 = vpop.f32.mrf.mxu0
      %v591 = vadd.f32 0.0, %v590
      %592 = vdwg.mxu0
      %v593 = vmul.f32 %v480, %v396
      %v594 = vmul.f32 %v483, %v397
      %v595 = vmul.f32 %v486, %v398
      %v596 = vmul.f32 %v489, %v399
      %v597 = vmul.f32 %v492, %v400
      %v598 = vmul.f32 %v495, %v401
      %v599 = vmul.f32 %v498, %v402
      %v600 = vmul.f32 %v501, %v403
      %v601 = vmul.f32 %v504, %v404
      %v602 = vmul.f32 %v507, %v405
      %v603 = vmul.f32 %v510, %v406
      %v604 = vmul.f32 %v513, %v407
      %v605 = vmul.f32 %v516, %v408
      %v606 = vmul.f32 %v519, %v409
      %v607 = vmul.f32 %v522, %v410
      %v608 = vmul.f32 %v525, %v411
      %v609 = vsel %vm413, %v593, 0.0
      %610 = vadd.xlane.f32.xlu0 %v609
      %v611 = vpop.xlane.xlu0 %610
      %v612 = vsel %vm413, %v594, 0.0
      %613 = vadd.xlane.f32.xlu0 %v612
      %v614 = vpop.xlane.xlu0 %613
      %v615 = vsel %vm413, %v595, 0.0
      %616 = vadd.xlane.f32.xlu0 %v615
      %v617 = vpop.xlane.xlu0 %616
      %v618 = vsel %vm413, %v596, 0.0
      %619 = vadd.xlane.f32.xlu0 %v618
      %v620 = vpop.xlane.xlu0 %619
      %v621 = vsel %vm413, %v597, 0.0
      %622 = vadd.xlane.f32.xlu0 %v621
      %v623 = vpop.xlane.xlu0 %622
      %v624 = vsel %vm413, %v598, 0.0
      %625 = vadd.xlane.f32.xlu0 %v624
      %v626 = vpop.xlane.xlu0 %625
      %v627 = vsel %vm413, %v599, 0.0
      %628 = vadd.xlane.f32.xlu0 %v627
      %v629 = vpop.xlane.xlu0 %628
      %v630 = vsel %vm413, %v600, 0.0
      %631 = vadd.xlane.f32.xlu0 %v630
      %v632 = vpop.xlane.xlu0 %631
      %v633 = vsel %vm413, %v601, 0.0
      %634 = vadd.xlane.f32.xlu0 %v633
      %v635 = vpop.xlane.xlu0 %634
      %v636 = vsel %vm413, %v602, 0.0
      %637 = vadd.xlane.f32.xlu0 %v636
      %v638 = vpop.xlane.xlu0 %637
      %v639 = vsel %vm413, %v603, 0.0
      %640 = vadd.xlane.f32.xlu0 %v639
      %v641 = vpop.xlane.xlu0 %640
      %v642 = vsel %vm413, %v604, 0.0
      %643 = vadd.xlane.f32.xlu0 %v642
      %v644 = vpop.xlane.xlu0 %643
      %v645 = vsel %vm413, %v605, 0.0
      %646 = vadd.xlane.f32.xlu0 %v645
      %v647 = vpop.xlane.xlu0 %646
      %v648 = vsel %vm413, %v606, 0.0
      %649 = vadd.xlane.f32.xlu0 %v648
      %v650 = vpop.xlane.xlu0 %649
      %v651 = vsel %vm413, %v607, 0.0
      %652 = vadd.xlane.f32.xlu0 %v651
      %v653 = vpop.xlane.xlu0 %652
      %v654 = vsel %vm413, %v608, 0.0
      %655 = vadd.xlane.f32.xlu0 %v654
      %v656 = vpop.xlane.xlu0 %655
      %v657 = vmul.f32 %v546, %v396
      %v658 = vmul.f32 %v549, %v397
      %v659 = vmul.f32 %v552, %v398
      %v660 = vmul.f32 %v555, %v399
      %v661 = vmul.f32 %v558, %v400
      %v662 = vmul.f32 %v561, %v401
      %v663 = vmul.f32 %v564, %v402
      %v664 = vmul.f32 %v567, %v403
      %v665 = vmul.f32 %v570, %v404
      %v666 = vmul.f32 %v573, %v405
      %v667 = vmul.f32 %v576, %v406
      %v668 = vmul.f32 %v579, %v407
      %v669 = vmul.f32 %v582, %v408
      %v670 = vmul.f32 %v585, %v409
      %v671 = vmul.f32 %v588, %v410
      %v672 = vmul.f32 %v591, %v411
      %v673 = vsel %vm413, %v657, 0.0
      %674 = vadd.xlane.f32.xlu0 %v673
      %v675 = vpop.xlane.xlu0 %674
      %v676 = vsel %vm413, %v658, 0.0
      %677 = vadd.xlane.f32.xlu0 %v676
      %v678 = vpop.xlane.xlu0 %677
      %v679 = vsel %vm413, %v659, 0.0
      %680 = vadd.xlane.f32.xlu0 %v679
      %v681 = vpop.xlane.xlu0 %680
      %v682 = vsel %vm413, %v660, 0.0
      %683 = vadd.xlane.f32.xlu0 %v682
      %v684 = vpop.xlane.xlu0 %683
      %v685 = vsel %vm413, %v661, 0.0
      %686 = vadd.xlane.f32.xlu0 %v685
      %v687 = vpop.xlane.xlu0 %686
      %v688 = vsel %vm413, %v662, 0.0
      %689 = vadd.xlane.f32.xlu0 %v688
      %v690 = vpop.xlane.xlu0 %689
      %v691 = vsel %vm413, %v663, 0.0
      %692 = vadd.xlane.f32.xlu0 %v691
      %v693 = vpop.xlane.xlu0 %692
      %v694 = vsel %vm413, %v664, 0.0
      %695 = vadd.xlane.f32.xlu0 %v694
      %v696 = vpop.xlane.xlu0 %695
      %v697 = vsel %vm413, %v665, 0.0
      %698 = vadd.xlane.f32.xlu0 %v697
      %v699 = vpop.xlane.xlu0 %698
      %v700 = vsel %vm413, %v666, 0.0
      %701 = vadd.xlane.f32.xlu0 %v700
      %v702 = vpop.xlane.xlu0 %701
      %v703 = vsel %vm413, %v667, 0.0
      %704 = vadd.xlane.f32.xlu0 %v703
      %v705 = vpop.xlane.xlu0 %704
      %v706 = vsel %vm413, %v668, 0.0
      %707 = vadd.xlane.f32.xlu0 %v706
      %v708 = vpop.xlane.xlu0 %707
      %v709 = vsel %vm413, %v669, 0.0
      %710 = vadd.xlane.f32.xlu0 %v709
      %v711 = vpop.xlane.xlu0 %710
      %v712 = vsel %vm413, %v670, 0.0
      %713 = vadd.xlane.f32.xlu0 %v712
      %v714 = vpop.xlane.xlu0 %713
      %v715 = vsel %vm413, %v671, 0.0
      %716 = vadd.xlane.f32.xlu0 %v715
      %v717 = vpop.xlane.xlu0 %716
      %v718 = vsel %vm413, %v672, 0.0
      %719 = vadd.xlane.f32.xlu0 %v718
      %v720 = vpop.xlane.xlu0 %719
      %vm721 = vcmask 7168
      %722 = vst.msk [vmem:[%s372] sm:$0xff] %vm721, %v611
      %723 = vst.msk [vmem:[%s372 + $0x8] sm:$0xff] %vm721, %v614
      %724 = vst.msk [vmem:[%s372 + $0x10] sm:$0xff] %vm721, %v617
      %725 = vst.msk [vmem:[%s372 + $0x18] sm:$0xff] %vm721, %v620
      %726 = vst.msk [vmem:[%s372 + $0x20] sm:$0xff] %vm721, %v623
      %727 = vst.msk [vmem:[%s372 + $0x28] sm:$0xff] %vm721, %v626
      %728 = vst.msk [vmem:[%s372 + $0x30] sm:$0xff] %vm721, %v629
      %729 = vst.msk [vmem:[%s372 + $0x38] sm:$0xff] %vm721, %v632
      %730 = vst.msk [vmem:[%s372 + $0x40] sm:$0xff] %vm721, %v635
      %731 = vst.msk [vmem:[%s372 + $0x48] sm:$0xff] %vm721, %v638
      %732 = vst.msk [vmem:[%s372 + $0x50] sm:$0xff] %vm721, %v641
      %733 = vst.msk [vmem:[%s372 + $0x58] sm:$0xff] %vm721, %v644
      %734 = vst.msk [vmem:[%s372 + $0x60] sm:$0xff] %vm721, %v647
      %735 = vst.msk [vmem:[%s372 + $0x68] sm:$0xff] %vm721, %v650
      %736 = vst.msk [vmem:[%s372 + $0x70] sm:$0xff] %vm721, %v653
      %737 = vst.msk [vmem:[%s372 + $0x78] sm:$0xff] %vm721, %v656
      %738 = vst.msk [vmem:[%s378] sm:$0xff] %vm721, %v675
      %739 = vst.msk [vmem:[%s378 + $0x8] sm:$0xff] %vm721, %v678
      %740 = vst.msk [vmem:[%s378 + $0x10] sm:$0xff] %vm721, %v681
      %741 = vst.msk [vmem:[%s378 + $0x18] sm:$0xff] %vm721, %v684
      %742 = vst.msk [vmem:[%s378 + $0x20] sm:$0xff] %vm721, %v687
      %743 = vst.msk [vmem:[%s378 + $0x28] sm:$0xff] %vm721, %v690
      %744 = vst.msk [vmem:[%s378 + $0x30] sm:$0xff] %vm721, %v693
      %745 = vst.msk [vmem:[%s378 + $0x38] sm:$0xff] %vm721, %v696
      %746 = vst.msk [vmem:[%s378 + $0x40] sm:$0xff] %vm721, %v699
      %747 = vst.msk [vmem:[%s378 + $0x48] sm:$0xff] %vm721, %v702
      %748 = vst.msk [vmem:[%s378 + $0x50] sm:$0xff] %vm721, %v705
      %749 = vst.msk [vmem:[%s378 + $0x58] sm:$0xff] %vm721, %v708
      %750 = vst.msk [vmem:[%s378 + $0x60] sm:$0xff] %vm721, %v711
      %751 = vst.msk [vmem:[%s378 + $0x68] sm:$0xff] %vm721, %v714
      %752 = vst.msk [vmem:[%s378 + $0x70] sm:$0xff] %vm721, %v717
      %753 = vst.msk [vmem:[%s378 + $0x78] sm:$0xff] %vm721, %v720
      %v754 = vld [vmem:[%s360] sm:$0xff]
      %v755 = vld [vmem:[%s360 + $0x8] sm:$0xff]
      %v756 = vld [vmem:[%s360 + $0x10] sm:$0xff]
      %v757 = vld [vmem:[%s360 + $0x18] sm:$0xff]
      %v758 = vld [vmem:[%s360 + $0x20] sm:$0xff]
      %v759 = vld [vmem:[%s360 + $0x28] sm:$0xff]
      %v760 = vld [vmem:[%s360 + $0x30] sm:$0xff]
      %v761 = vld [vmem:[%s360 + $0x38] sm:$0xff]
      %v762 = vld [vmem:[%s360 + $0x40] sm:$0xff]
      %v763 = vld [vmem:[%s360 + $0x48] sm:$0xff]
      %v764 = vld [vmem:[%s360 + $0x50] sm:$0xff]
      %v765 = vld [vmem:[%s360 + $0x58] sm:$0xff]
      %v766 = vld [vmem:[%s360 + $0x60] sm:$0xff]
      %v767 = vld [vmem:[%s360 + $0x68] sm:$0xff]
      %v768 = vld [vmem:[%s360 + $0x70] sm:$0xff]
      %v769 = vld [vmem:[%s360 + $0x78] sm:$0xff]
      %v770 = vmul.f32 %v611, 7.5
      %v771 = vmul.f32 %v614, 7.5
      %v772 = vmul.f32 %v617, 7.5
      %v773 = vmul.f32 %v620, 7.5
      %v774 = vmul.f32 %v623, 7.5
      %v775 = vmul.f32 %v626, 7.5
      %v776 = vmul.f32 %v629, 7.5
      %v777 = vmul.f32 %v632, 7.5
      %v778 = vmul.f32 %v635, 7.5
      %v779 = vmul.f32 %v638, 7.5
      %v780 = vmul.f32 %v641, 7.5
      %v781 = vmul.f32 %v644, 7.5
      %v782 = vmul.f32 %v647, 7.5
      %v783 = vmul.f32 %v650, 7.5
      %v784 = vmul.f32 %v653, 7.5
      %v785 = vmul.f32 %v656, 7.5
      %v786 = vadd.f32 %v770, %v754
      %v787 = vadd.f32 %v771, %v755
      %v788 = vadd.f32 %v772, %v756
      %v789 = vadd.f32 %v773, %v757
      %v790 = vadd.f32 %v774, %v758
      %v791 = vadd.f32 %v775, %v759
      %v792 = vadd.f32 %v776, %v760
      %v793 = vadd.f32 %v777, %v761
      %v794 = vadd.f32 %v778, %v762
      %v795 = vadd.f32 %v779, %v763
      %v796 = vadd.f32 %v780, %v764
      %v797 = vadd.f32 %v781, %v765
      %v798 = vadd.f32 %v782, %v766
      %v799 = vadd.f32 %v783, %v767
      %v800 = vadd.f32 %v784, %v768
      %v801 = vadd.f32 %v785, %v769
      %v802 = vmul.f32 %v675, 7.5
      %v803 = vmul.f32 %v678, 7.5
      %v804 = vmul.f32 %v681, 7.5
      %v805 = vmul.f32 %v684, 7.5
      %v806 = vmul.f32 %v687, 7.5
      %v807 = vmul.f32 %v690, 7.5
      %v808 = vmul.f32 %v693, 7.5
      %v809 = vmul.f32 %v696, 7.5
      %v810 = vmul.f32 %v699, 7.5
      %v811 = vmul.f32 %v702, 7.5
      %v812 = vmul.f32 %v705, 7.5
      %v813 = vmul.f32 %v708, 7.5
      %v814 = vmul.f32 %v711, 7.5
      %v815 = vmul.f32 %v714, 7.5
      %v816 = vmul.f32 %v717, 7.5
      %v817 = vmul.f32 %v720, 7.5
      %v818 = vadd.f32 %v802, %v754
      %v819 = vadd.f32 %v803, %v755
      %v820 = vadd.f32 %v804, %v756
      %v821 = vadd.f32 %v805, %v757
      %v822 = vadd.f32 %v806, %v758
      %v823 = vadd.f32 %v807, %v759
      %v824 = vadd.f32 %v808, %v760
      %v825 = vadd.f32 %v809, %v761
      %v826 = vadd.f32 %v810, %v762
      %v827 = vadd.f32 %v811, %v763
      %v828 = vadd.f32 %v812, %v764
      %v829 = vadd.f32 %v813, %v765
      %v830 = vadd.f32 %v814, %v766
      %v831 = vadd.f32 %v815, %v767
      %v832 = vadd.f32 %v816, %v768
      %v833 = vadd.f32 %v817, %v769
      %v834 = vlaneseq
      %v835 = vand.u32 %v834, 127
      %v836 = vcvt.s32.f32 %v835
      %838 = vset.pattern.permute.xlu0 1
      %839 = vperm.xlu0 %838, %v818
      %v840 = vpop.permute.xlu0 %839
      %843 = vset.pattern.permute.xlu0 1
      %844 = vperm.xlu0 %843, %v819
      %v845 = vpop.permute.xlu0 %844
      %848 = vset.pattern.permute.xlu0 1
      %849 = vperm.xlu0 %848, %v820
      %v850 = vpop.permute.xlu0 %849
      %853 = vset.pattern.permute.xlu0 1
      %854 = vperm.xlu0 %853, %v821
      %v855 = vpop.permute.xlu0 %854
      %858 = vset.pattern.permute.xlu0 1
      %859 = vperm.xlu0 %858, %v822
      %v860 = vpop.permute.xlu0 %859
      %863 = vset.pattern.permute.xlu0 1
      %864 = vperm.xlu0 %863, %v823
      %v865 = vpop.permute.xlu0 %864
      %868 = vset.pattern.permute.xlu0 1
      %869 = vperm.xlu0 %868, %v824
      %v870 = vpop.permute.xlu0 %869
      %873 = vset.pattern.permute.xlu0 1
      %874 = vperm.xlu0 %873, %v825
      %v875 = vpop.permute.xlu0 %874
      %878 = vset.pattern.permute.xlu0 1
      %879 = vperm.xlu0 %878, %v826
      %v880 = vpop.permute.xlu0 %879
      %883 = vset.pattern.permute.xlu0 1
      %884 = vperm.xlu0 %883, %v827
      %v885 = vpop.permute.xlu0 %884
      %888 = vset.pattern.permute.xlu0 1
      %889 = vperm.xlu0 %888, %v828
      %v890 = vpop.permute.xlu0 %889
      %893 = vset.pattern.permute.xlu0 1
      %894 = vperm.xlu0 %893, %v829
      %v895 = vpop.permute.xlu0 %894
      %898 = vset.pattern.permute.xlu0 1
      %899 = vperm.xlu0 %898, %v830
      %v900 = vpop.permute.xlu0 %899
      %903 = vset.pattern.permute.xlu0 1
      %904 = vperm.xlu0 %903, %v831
      %v905 = vpop.permute.xlu0 %904
      %908 = vset.pattern.permute.xlu0 1
      %909 = vperm.xlu0 %908, %v832
      %v910 = vpop.permute.xlu0 %909
      %913 = vset.pattern.permute.xlu0 1
      %914 = vperm.xlu0 %913, %v833
      %v915 = vpop.permute.xlu0 %914
      %v917 = vsub.f32 %v840, %v836
      %v918 = vsub.f32 %v845, %v836
      %v919 = vsub.f32 %v850, %v836
      %v920 = vsub.f32 %v855, %v836
      %v921 = vsub.f32 %v860, %v836
      %v922 = vsub.f32 %v865, %v836
      %v923 = vsub.f32 %v870, %v836
      %v924 = vsub.f32 %v875, %v836
      %v925 = vsub.f32 %v880, %v836
      %v926 = vsub.f32 %v885, %v836
      %v927 = vsub.f32 %v890, %v836
      %v928 = vsub.f32 %v895, %v836
      %v929 = vsub.f32 %v900, %v836
      %v930 = vsub.f32 %v905, %v836
      %v931 = vsub.f32 %v910, %v836
      %v932 = vsub.f32 %v915, %v836
      %v933 = vand.u32 2147483647, %v917
      %v934 = vand.u32 2147483647, %v918
      %v935 = vand.u32 2147483647, %v919
      %v936 = vand.u32 2147483647, %v920
      %v937 = vand.u32 2147483647, %v921
      %v938 = vand.u32 2147483647, %v922
      %v939 = vand.u32 2147483647, %v923
      %v940 = vand.u32 2147483647, %v924
      %v941 = vand.u32 2147483647, %v925
      %v942 = vand.u32 2147483647, %v926
      %v943 = vand.u32 2147483647, %v927
      %v944 = vand.u32 2147483647, %v928
      %v945 = vand.u32 2147483647, %v929
      %v946 = vand.u32 2147483647, %v930
      %v947 = vand.u32 2147483647, %v931
      %v948 = vand.u32 2147483647, %v932
      %v949 = vmul.f32 %v933, %v933
      %v950 = vmul.f32 %v934, %v934
      %v951 = vmul.f32 %v935, %v935
      %v952 = vmul.f32 %v936, %v936
      %v953 = vmul.f32 %v937, %v937
      %v954 = vmul.f32 %v938, %v938
      %v955 = vmul.f32 %v939, %v939
      %v956 = vmul.f32 %v940, %v940
      %v957 = vmul.f32 %v941, %v941
      %v958 = vmul.f32 %v942, %v942
      %v959 = vmul.f32 %v943, %v943
      %v960 = vmul.f32 %v944, %v944
      %v961 = vmul.f32 %v945, %v945
      %v962 = vmul.f32 %v946, %v946
      %v963 = vmul.f32 %v947, %v947
      %v964 = vmul.f32 %v948, %v948
      %v965 = vmul.f32 %v949, %v933
      %v966 = vmul.f32 %v950, %v934
      %v967 = vmul.f32 %v951, %v935
      %v968 = vmul.f32 %v952, %v936
      %v969 = vmul.f32 %v953, %v937
      %v970 = vmul.f32 %v954, %v938
      %v971 = vmul.f32 %v955, %v939
      %v972 = vmul.f32 %v956, %v940
      %v973 = vmul.f32 %v957, %v941
      %v974 = vmul.f32 %v958, %v942
      %v975 = vmul.f32 %v959, %v943
      %v976 = vmul.f32 %v960, %v944
      %v977 = vmul.f32 %v961, %v945
      %v978 = vmul.f32 %v962, %v946
      %v979 = vmul.f32 %v963, %v947
      %v980 = vmul.f32 %v964, %v948
      %v981 = vmul.f32 %v965, 1.25
      %v982 = vmul.f32 %v966, 1.25
      %v983 = vmul.f32 %v967, 1.25
      %v984 = vmul.f32 %v968, 1.25
      %v985 = vmul.f32 %v969, 1.25
      %v986 = vmul.f32 %v970, 1.25
      %v987 = vmul.f32 %v971, 1.25
      %v988 = vmul.f32 %v972, 1.25
      %v989 = vmul.f32 %v973, 1.25
      %v990 = vmul.f32 %v974, 1.25
      %v991 = vmul.f32 %v975, 1.25
      %v992 = vmul.f32 %v976, 1.25
      %v993 = vmul.f32 %v977, 1.25
      %v994 = vmul.f32 %v978, 1.25
      %v995 = vmul.f32 %v979, 1.25
      %v996 = vmul.f32 %v980, 1.25
      %v997 = vmul.f32 %v949, 2.25
      %v998 = vmul.f32 %v950, 2.25
      %v999 = vmul.f32 %v951, 2.25
      %v1000 = vmul.f32 %v952, 2.25
      %v1001 = vmul.f32 %v953, 2.25
      %v1002 = vmul.f32 %v954, 2.25
      %v1003 = vmul.f32 %v955, 2.25
      %v1004 = vmul.f32 %v956, 2.25
      %v1005 = vmul.f32 %v957, 2.25
      %v1006 = vmul.f32 %v958, 2.25
      %v1007 = vmul.f32 %v959, 2.25
      %v1008 = vmul.f32 %v960, 2.25
      %v1009 = vmul.f32 %v961, 2.25
      %v1010 = vmul.f32 %v962, 2.25
      %v1011 = vmul.f32 %v963, 2.25
      %v1012 = vmul.f32 %v964, 2.25
      %v1013 = vsub.f32 %v981, %v997
      %v1014 = vsub.f32 %v982, %v998
      %v1015 = vsub.f32 %v983, %v999
      %v1016 = vsub.f32 %v984, %v1000
      %v1017 = vsub.f32 %v985, %v1001
      %v1018 = vsub.f32 %v986, %v1002
      %v1019 = vsub.f32 %v987, %v1003
      %v1020 = vsub.f32 %v988, %v1004
      %v1021 = vsub.f32 %v989, %v1005
      %v1022 = vsub.f32 %v990, %v1006
      %v1023 = vsub.f32 %v991, %v1007
      %v1024 = vsub.f32 %v992, %v1008
      %v1025 = vsub.f32 %v993, %v1009
      %v1026 = vsub.f32 %v994, %v1010
      %v1027 = vsub.f32 %v995, %v1011
      %v1028 = vsub.f32 %v996, %v1012
      %v1029 = vadd.f32 %v1013, 1.0
      %v1030 = vadd.f32 %v1014, 1.0
      %v1031 = vadd.f32 %v1015, 1.0
      %v1032 = vadd.f32 %v1016, 1.0
      %v1033 = vadd.f32 %v1017, 1.0
      %v1034 = vadd.f32 %v1018, 1.0
      %v1035 = vadd.f32 %v1019, 1.0
      %v1036 = vadd.f32 %v1020, 1.0
      %v1037 = vadd.f32 %v1021, 1.0
      %v1038 = vadd.f32 %v1022, 1.0
      %v1039 = vadd.f32 %v1023, 1.0
      %v1040 = vadd.f32 %v1024, 1.0
      %v1041 = vadd.f32 %v1025, 1.0
      %v1042 = vadd.f32 %v1026, 1.0
      %v1043 = vadd.f32 %v1027, 1.0
      %v1044 = vadd.f32 %v1028, 1.0
      %v1045 = vmul.f32 %v965, -0.75
      %v1046 = vmul.f32 %v966, -0.75
      %v1047 = vmul.f32 %v967, -0.75
      %v1048 = vmul.f32 %v968, -0.75
      %v1049 = vmul.f32 %v969, -0.75
      %v1050 = vmul.f32 %v970, -0.75
      %v1051 = vmul.f32 %v971, -0.75
      %v1052 = vmul.f32 %v972, -0.75
      %v1053 = vmul.f32 %v973, -0.75
      %v1054 = vmul.f32 %v974, -0.75
      %v1055 = vmul.f32 %v975, -0.75
      %v1056 = vmul.f32 %v976, -0.75
      %v1057 = vmul.f32 %v977, -0.75
      %v1058 = vmul.f32 %v978, -0.75
      %v1059 = vmul.f32 %v979, -0.75
      %v1060 = vmul.f32 %v980, -0.75
      %v1061 = vmul.f32 %v949, -3.75
      %v1062 = vmul.f32 %v950, -3.75
      %v1063 = vmul.f32 %v951, -3.75
      %v1064 = vmul.f32 %v952, -3.75
      %v1065 = vmul.f32 %v953, -3.75
      %v1066 = vmul.f32 %v954, -3.75
      %v1067 = vmul.f32 %v955, -3.75
      %v1068 = vmul.f32 %v956, -3.75
      %v1069 = vmul.f32 %v957, -3.75
      %v1070 = vmul.f32 %v958, -3.75
      %v1071 = vmul.f32 %v959, -3.75
      %v1072 = vmul.f32 %v960, -3.75
      %v1073 = vmul.f32 %v961, -3.75
      %v1074 = vmul.f32 %v962, -3.75
      %v1075 = vmul.f32 %v963, -3.75
      %v1076 = vmul.f32 %v964, -3.75
      %v1077 = vsub.f32 %v1045, %v1061
      %v1078 = vsub.f32 %v1046, %v1062
      %v1079 = vsub.f32 %v1047, %v1063
      %v1080 = vsub.f32 %v1048, %v1064
      %v1081 = vsub.f32 %v1049, %v1065
      %v1082 = vsub.f32 %v1050, %v1066
      %v1083 = vsub.f32 %v1051, %v1067
      %v1084 = vsub.f32 %v1052, %v1068
      %v1085 = vsub.f32 %v1053, %v1069
      %v1086 = vsub.f32 %v1054, %v1070
      %v1087 = vsub.f32 %v1055, %v1071
      %v1088 = vsub.f32 %v1056, %v1072
      %v1089 = vsub.f32 %v1057, %v1073
      %v1090 = vsub.f32 %v1058, %v1074
      %v1091 = vsub.f32 %v1059, %v1075
      %v1092 = vsub.f32 %v1060, %v1076
      %v1093 = vmul.f32 %v933, -6.0
      %v1094 = vmul.f32 %v934, -6.0
      %v1095 = vmul.f32 %v935, -6.0
      %v1096 = vmul.f32 %v936, -6.0
      %v1097 = vmul.f32 %v937, -6.0
      %v1098 = vmul.f32 %v938, -6.0
      %v1099 = vmul.f32 %v939, -6.0
      %v1100 = vmul.f32 %v940, -6.0
      %v1101 = vmul.f32 %v941, -6.0
      %v1102 = vmul.f32 %v942, -6.0
      %v1103 = vmul.f32 %v943, -6.0
      %v1104 = vmul.f32 %v944, -6.0
      %v1105 = vmul.f32 %v945, -6.0
      %v1106 = vmul.f32 %v946, -6.0
      %v1107 = vmul.f32 %v947, -6.0
      %v1108 = vmul.f32 %v948, -6.0
      %v1109 = vadd.f32 %v1077, %v1093
      %v1110 = vadd.f32 %v1078, %v1094
      %v1111 = vadd.f32 %v1079, %v1095
      %v1112 = vadd.f32 %v1080, %v1096
      %v1113 = vadd.f32 %v1081, %v1097
      %v1114 = vadd.f32 %v1082, %v1098
      %v1115 = vadd.f32 %v1083, %v1099
      %v1116 = vadd.f32 %v1084, %v1100
      %v1117 = vadd.f32 %v1085, %v1101
      %v1118 = vadd.f32 %v1086, %v1102
      %v1119 = vadd.f32 %v1087, %v1103
      %v1120 = vadd.f32 %v1088, %v1104
      %v1121 = vadd.f32 %v1089, %v1105
      %v1122 = vadd.f32 %v1090, %v1106
      %v1123 = vadd.f32 %v1091, %v1107
      %v1124 = vadd.f32 %v1092, %v1108
      %v1125 = vsub.f32 %v1109, -3.0
      %v1126 = vsub.f32 %v1110, -3.0
      %v1127 = vsub.f32 %v1111, -3.0
      %v1128 = vsub.f32 %v1112, -3.0
      %v1129 = vsub.f32 %v1113, -3.0
      %v1130 = vsub.f32 %v1114, -3.0
      %v1131 = vsub.f32 %v1115, -3.0
      %v1132 = vsub.f32 %v1116, -3.0
      %v1133 = vsub.f32 %v1117, -3.0
      %v1134 = vsub.f32 %v1118, -3.0
      %v1135 = vsub.f32 %v1119, -3.0
      %v1136 = vsub.f32 %v1120, -3.0
      %v1137 = vsub.f32 %v1121, -3.0
      %v1138 = vsub.f32 %v1122, -3.0
      %v1139 = vsub.f32 %v1123, -3.0
      %v1140 = vsub.f32 %v1124, -3.0
      %vm1141 = vcmp.le.f32.partialorder %v933, 1.0
      %vm1142 = vcmp.le.f32.partialorder %v934, 1.0
      %vm1143 = vcmp.le.f32.partialorder %v935, 1.0
      %vm1144 = vcmp.le.f32.partialorder %v936, 1.0
      %vm1145 = vcmp.le.f32.partialorder %v937, 1.0
      %vm1146 = vcmp.le.f32.partialorder %v938, 1.0
      %vm1147 = vcmp.le.f32.partialorder %v939, 1.0
      %vm1148 = vcmp.le.f32.partialorder %v940, 1.0
      %vm1149 = vcmp.le.f32.partialorder %v941, 1.0
      %vm1150 = vcmp.le.f32.partialorder %v942, 1.0
      %vm1151 = vcmp.le.f32.partialorder %v943, 1.0
      %vm1152 = vcmp.le.f32.partialorder %v944, 1.0
      %vm1153 = vcmp.le.f32.partialorder %v945, 1.0
      %vm1154 = vcmp.le.f32.partialorder %v946, 1.0
      %vm1155 = vcmp.le.f32.partialorder %v947, 1.0
      %vm1156 = vcmp.le.f32.partialorder %v948, 1.0
      %vm1157 = vcmp.lt.f32.partialorder %v933, 2.0
      %vm1158 = vcmp.lt.f32.partialorder %v934, 2.0
      %vm1159 = vcmp.lt.f32.partialorder %v935, 2.0
      %vm1160 = vcmp.lt.f32.partialorder %v936, 2.0
      %vm1161 = vcmp.lt.f32.partialorder %v937, 2.0
      %vm1162 = vcmp.lt.f32.partialorder %v938, 2.0
      %vm1163 = vcmp.lt.f32.partialorder %v939, 2.0
      %vm1164 = vcmp.lt.f32.partialorder %v940, 2.0
      %vm1165 = vcmp.lt.f32.partialorder %v941, 2.0
      %vm1166 = vcmp.lt.f32.partialorder %v942, 2.0
      %vm1167 = vcmp.lt.f32.partialorder %v943, 2.0
      %vm1168 = vcmp.lt.f32.partialorder %v944, 2.0
      %vm1169 = vcmp.lt.f32.partialorder %v945, 2.0
      %vm1170 = vcmp.lt.f32.partialorder %v946, 2.0
      %vm1171 = vcmp.lt.f32.partialorder %v947, 2.0
      %vm1172 = vcmp.lt.f32.partialorder %v948, 2.0
      %v1173 = vsel %vm1157, %v1125, 0.0
      %v1174 = vsel %vm1158, %v1126, 0.0
      %v1175 = vsel %vm1159, %v1127, 0.0
      %v1176 = vsel %vm1160, %v1128, 0.0
      %v1177 = vsel %vm1161, %v1129, 0.0
      %v1178 = vsel %vm1162, %v1130, 0.0
      %v1179 = vsel %vm1163, %v1131, 0.0
      %v1180 = vsel %vm1164, %v1132, 0.0
      %v1181 = vsel %vm1165, %v1133, 0.0
      %v1182 = vsel %vm1166, %v1134, 0.0
      %v1183 = vsel %vm1167, %v1135, 0.0
      %v1184 = vsel %vm1168, %v1136, 0.0
      %v1185 = vsel %vm1169, %v1137, 0.0
      %v1186 = vsel %vm1170, %v1138, 0.0
      %v1187 = vsel %vm1171, %v1139, 0.0
      %v1188 = vsel %vm1172, %v1140, 0.0
      %v1189 = vsel %vm1141, %v1029, %v1173
      %v1190 = vsel %vm1142, %v1030, %v1174
      %v1191 = vsel %vm1143, %v1031, %v1175
      %v1192 = vsel %vm1144, %v1032, %v1176
      %v1193 = vsel %vm1145, %v1033, %v1177
      %v1194 = vsel %vm1146, %v1034, %v1178
      %v1195 = vsel %vm1147, %v1035, %v1179
      %v1196 = vsel %vm1148, %v1036, %v1180
      %v1197 = vsel %vm1149, %v1037, %v1181
      %v1198 = vsel %vm1150, %v1038, %v1182
      %v1199 = vsel %vm1151, %v1039, %v1183
      %v1200 = vsel %vm1152, %v1040, %v1184
      %v1201 = vsel %vm1153, %v1041, %v1185
      %v1202 = vsel %vm1154, %v1042, %v1186
      %v1203 = vsel %vm1155, %v1043, %v1187
      %v1204 = vsel %vm1156, %v1044, %v1188
      %v1205 = vld [vmem:[%s5] sm:$0xff]
      %v1206 = vld [vmem:[%s5 + $0x8] sm:$0xff]
      %vm1207 = vcmask 130048
      %v1209 = vsel %vm1207, %v1189, 0
      %v1212 = vsel %vm1207, %v1190, 0
      %v1215 = vsel %vm1207, %v1191, 0
      %v1218 = vsel %vm1207, %v1192, 0
      %v1221 = vsel %vm1207, %v1193, 0
      %v1224 = vsel %vm1207, %v1194, 0
      %v1227 = vsel %vm1207, %v1195, 0
      %v1230 = vsel %vm1207, %v1196, 0
      %v1233 = vsel %vm1207, %v1197, 0
      %v1236 = vsel %vm1207, %v1198, 0
      %v1239 = vsel %vm1207, %v1199, 0
      %v1242 = vsel %vm1207, %v1200, 0
      %v1245 = vsel %vm1207, %v1201, 0
      %v1248 = vsel %vm1207, %v1202, 0
      %v1251 = vsel %vm1207, %v1203, 0
      %v1254 = vsel %vm1207, %v1204, 0
      %1256 = vmatpush.msra.mxu0 0.0
      %1257 = vmatpush.msra.mxu0 0.0
      %1258 = vmatpush.msra.mxu0 0.0
      %1259 = vmatpush.msra.mxu0 0.0
      %1260 = vmatpush.msra.mxu0 0.0
      %1261 = vmatpush.msra.mxu0 0.0
      %1262 = vmatpush.msra.mxu0 0.0
      %1263 = vmatpush.msra.mxu0 0.0
      %1264 = vmatpush.msra.mxu0 0.0
      %1265 = vmatpush.msra.mxu0 0.0
      %1266 = vmatpush.msra.mxu0 0.0
      %1267 = vmatpush.msra.mxu0 0.0
      %1268 = vmatpush.msra.mxu0 0.0
      %1269 = vmatpush.msra.mxu0 0.0
      %1270 = vmatpush.msra.mxu0 %v1206
      %1271 = vmatpush.msra.mxu0 %v1205
      %1272 = vmatmul.f32.gmra.mxu0 %v1209
      %v1273 = vpop.f32.mrf.mxu0
      %v1274 = vadd.f32 0.0, %v1273
      %1275 = vmatmul.f32.gmra.mxu0 %v1212
      %v1276 = vpop.f32.mrf.mxu0
      %v1277 = vadd.f32 0.0, %v1276
      %1278 = vmatmul.f32.gmra.mxu0 %v1215
      %v1279 = vpop.f32.mrf.mxu0
      %v1280 = vadd.f32 0.0, %v1279
      %1281 = vmatmul.f32.gmra.mxu0 %v1218
      %v1282 = vpop.f32.mrf.mxu0
      %v1283 = vadd.f32 0.0, %v1282
      %1284 = vmatmul.f32.gmra.mxu0 %v1221
      %v1285 = vpop.f32.mrf.mxu0
      %v1286 = vadd.f32 0.0, %v1285
      %1287 = vmatmul.f32.gmra.mxu0 %v1224
      %v1288 = vpop.f32.mrf.mxu0
      %v1289 = vadd.f32 0.0, %v1288
      %1290 = vmatmul.f32.gmra.mxu0 %v1227
      %v1291 = vpop.f32.mrf.mxu0
      %v1292 = vadd.f32 0.0, %v1291
      %1293 = vmatmul.f32.gmra.mxu0 %v1230
      %v1294 = vpop.f32.mrf.mxu0
      %v1295 = vadd.f32 0.0, %v1294
      %1296 = vmatmul.f32.gmra.mxu0 %v1233
      %v1297 = vpop.f32.mrf.mxu0
      %v1298 = vadd.f32 0.0, %v1297
      %1299 = vmatmul.f32.gmra.mxu0 %v1236
      %v1300 = vpop.f32.mrf.mxu0
      %v1301 = vadd.f32 0.0, %v1300
      %1302 = vmatmul.f32.gmra.mxu0 %v1239
      %v1303 = vpop.f32.mrf.mxu0
      %v1304 = vadd.f32 0.0, %v1303
      %1305 = vmatmul.f32.gmra.mxu0 %v1242
      %v1306 = vpop.f32.mrf.mxu0
      %v1307 = vadd.f32 0.0, %v1306
      %1308 = vmatmul.f32.gmra.mxu0 %v1245
      %v1309 = vpop.f32.mrf.mxu0
      %v1310 = vadd.f32 0.0, %v1309
      %1311 = vmatmul.f32.gmra.mxu0 %v1248
      %v1312 = vpop.f32.mrf.mxu0
      %v1313 = vadd.f32 0.0, %v1312
      %1314 = vmatmul.f32.gmra.mxu0 %v1251
      %v1315 = vpop.f32.mrf.mxu0
      %v1316 = vadd.f32 0.0, %v1315
      %1317 = vmatmul.f32.gmra.mxu0 %v1254
      %v1318 = vpop.f32.mrf.mxu0
      %v1319 = vadd.f32 0.0, %v1318
      %1320 = vdwg.mxu0
      %1322 = vset.pattern.permute.xlu0 0
      %1323 = vperm.xlu0 %1322, %v786
      %v1324 = vpop.permute.xlu0 %1323
      %1327 = vset.pattern.permute.xlu0 0
      %1328 = vperm.xlu0 %1327, %v787
      %v1329 = vpop.permute.xlu0 %1328
      %1332 = vset.pattern.permute.xlu0 0
      %1333 = vperm.xlu0 %1332, %v788
      %v1334 = vpop.permute.xlu0 %1333
      %1337 = vset.pattern.permute.xlu0 0
      %1338 = vperm.xlu0 %1337, %v789
      %v1339 = vpop.permute.xlu0 %1338
      %1342 = vset.pattern.permute.xlu0 0
      %1343 = vperm.xlu0 %1342, %v790
      %v1344 = vpop.permute.xlu0 %1343
      %1347 = vset.pattern.permute.xlu0 0
      %1348 = vperm.xlu0 %1347, %v791
      %v1349 = vpop.permute.xlu0 %1348
      %1352 = vset.pattern.permute.xlu0 0
      %1353 = vperm.xlu0 %1352, %v792
      %v1354 = vpop.permute.xlu0 %1353
      %1357 = vset.pattern.permute.xlu0 0
      %1358 = vperm.xlu0 %1357, %v793
      %v1359 = vpop.permute.xlu0 %1358
      %1362 = vset.pattern.permute.xlu0 0
      %1363 = vperm.xlu0 %1362, %v794
      %v1364 = vpop.permute.xlu0 %1363
      %1367 = vset.pattern.permute.xlu0 0
      %1368 = vperm.xlu0 %1367, %v795
      %v1369 = vpop.permute.xlu0 %1368
      %1372 = vset.pattern.permute.xlu0 0
      %1373 = vperm.xlu0 %1372, %v796
      %v1374 = vpop.permute.xlu0 %1373
      %1377 = vset.pattern.permute.xlu0 0
      %1378 = vperm.xlu0 %1377, %v797
      %v1379 = vpop.permute.xlu0 %1378
      %1382 = vset.pattern.permute.xlu0 0
      %1383 = vperm.xlu0 %1382, %v798
      %v1384 = vpop.permute.xlu0 %1383
      %1387 = vset.pattern.permute.xlu0 0
      %1388 = vperm.xlu0 %1387, %v799
      %v1389 = vpop.permute.xlu0 %1388
      %1392 = vset.pattern.permute.xlu0 0
      %1393 = vperm.xlu0 %1392, %v800
      %v1394 = vpop.permute.xlu0 %1393
      %1397 = vset.pattern.permute.xlu0 0
      %1398 = vperm.xlu0 %1397, %v801
      %v1399 = vpop.permute.xlu0 %1398
      %v1401 = vsub.f32 %v1324, %v836
      %v1402 = vsub.f32 %v1329, %v836
      %v1403 = vsub.f32 %v1334, %v836
      %v1404 = vsub.f32 %v1339, %v836
      %v1405 = vsub.f32 %v1344, %v836
      %v1406 = vsub.f32 %v1349, %v836
      %v1407 = vsub.f32 %v1354, %v836
      %v1408 = vsub.f32 %v1359, %v836
      %v1409 = vsub.f32 %v1364, %v836
      %v1410 = vsub.f32 %v1369, %v836
      %v1411 = vsub.f32 %v1374, %v836
      %v1412 = vsub.f32 %v1379, %v836
      %v1413 = vsub.f32 %v1384, %v836
      %v1414 = vsub.f32 %v1389, %v836
      %v1415 = vsub.f32 %v1394, %v836
      %v1416 = vsub.f32 %v1399, %v836
      %v1417 = vand.u32 2147483647, %v1401
      %v1418 = vand.u32 2147483647, %v1402
      %v1419 = vand.u32 2147483647, %v1403
      %v1420 = vand.u32 2147483647, %v1404
      %v1421 = vand.u32 2147483647, %v1405
      %v1422 = vand.u32 2147483647, %v1406
      %v1423 = vand.u32 2147483647, %v1407
      %v1424 = vand.u32 2147483647, %v1408
      %v1425 = vand.u32 2147483647, %v1409
      %v1426 = vand.u32 2147483647, %v1410
      %v1427 = vand.u32 2147483647, %v1411
      %v1428 = vand.u32 2147483647, %v1412
      %v1429 = vand.u32 2147483647, %v1413
      %v1430 = vand.u32 2147483647, %v1414
      %v1431 = vand.u32 2147483647, %v1415
      %v1432 = vand.u32 2147483647, %v1416
      %v1433 = vmul.f32 %v1417, %v1417
      %v1434 = vmul.f32 %v1418, %v1418
      %v1435 = vmul.f32 %v1419, %v1419
      %v1436 = vmul.f32 %v1420, %v1420
      %v1437 = vmul.f32 %v1421, %v1421
      %v1438 = vmul.f32 %v1422, %v1422
      %v1439 = vmul.f32 %v1423, %v1423
      %v1440 = vmul.f32 %v1424, %v1424
      %v1441 = vmul.f32 %v1425, %v1425
      %v1442 = vmul.f32 %v1426, %v1426
      %v1443 = vmul.f32 %v1427, %v1427
      %v1444 = vmul.f32 %v1428, %v1428
      %v1445 = vmul.f32 %v1429, %v1429
      %v1446 = vmul.f32 %v1430, %v1430
      %v1447 = vmul.f32 %v1431, %v1431
      %v1448 = vmul.f32 %v1432, %v1432
      %v1449 = vmul.f32 %v1433, %v1417
      %v1450 = vmul.f32 %v1434, %v1418
      %v1451 = vmul.f32 %v1435, %v1419
      %v1452 = vmul.f32 %v1436, %v1420
      %v1453 = vmul.f32 %v1437, %v1421
      %v1454 = vmul.f32 %v1438, %v1422
      %v1455 = vmul.f32 %v1439, %v1423
      %v1456 = vmul.f32 %v1440, %v1424
      %v1457 = vmul.f32 %v1441, %v1425
      %v1458 = vmul.f32 %v1442, %v1426
      %v1459 = vmul.f32 %v1443, %v1427
      %v1460 = vmul.f32 %v1444, %v1428
      %v1461 = vmul.f32 %v1445, %v1429
      %v1462 = vmul.f32 %v1446, %v1430
      %v1463 = vmul.f32 %v1447, %v1431
      %v1464 = vmul.f32 %v1448, %v1432
      %v1465 = vmul.f32 %v1449, 1.25
      %v1466 = vmul.f32 %v1450, 1.25
      %v1467 = vmul.f32 %v1451, 1.25
      %v1468 = vmul.f32 %v1452, 1.25
      %v1469 = vmul.f32 %v1453, 1.25
      %v1470 = vmul.f32 %v1454, 1.25
      %v1471 = vmul.f32 %v1455, 1.25
      %v1472 = vmul.f32 %v1456, 1.25
      %v1473 = vmul.f32 %v1457, 1.25
      %v1474 = vmul.f32 %v1458, 1.25
      %v1475 = vmul.f32 %v1459, 1.25
      %v1476 = vmul.f32 %v1460, 1.25
      %v1477 = vmul.f32 %v1461, 1.25
      %v1478 = vmul.f32 %v1462, 1.25
      %v1479 = vmul.f32 %v1463, 1.25
      %v1480 = vmul.f32 %v1464, 1.25
      %v1481 = vmul.f32 %v1433, 2.25
      %v1482 = vmul.f32 %v1434, 2.25
      %v1483 = vmul.f32 %v1435, 2.25
      %v1484 = vmul.f32 %v1436, 2.25
      %v1485 = vmul.f32 %v1437, 2.25
      %v1486 = vmul.f32 %v1438, 2.25
      %v1487 = vmul.f32 %v1439, 2.25
      %v1488 = vmul.f32 %v1440, 2.25
      %v1489 = vmul.f32 %v1441, 2.25
      %v1490 = vmul.f32 %v1442, 2.25
      %v1491 = vmul.f32 %v1443, 2.25
      %v1492 = vmul.f32 %v1444, 2.25
      %v1493 = vmul.f32 %v1445, 2.25
      %v1494 = vmul.f32 %v1446, 2.25
      %v1495 = vmul.f32 %v1447, 2.25
      %v1496 = vmul.f32 %v1448, 2.25
      %v1497 = vsub.f32 %v1465, %v1481
      %v1498 = vsub.f32 %v1466, %v1482
      %v1499 = vsub.f32 %v1467, %v1483
      %v1500 = vsub.f32 %v1468, %v1484
      %v1501 = vsub.f32 %v1469, %v1485
      %v1502 = vsub.f32 %v1470, %v1486
      %v1503 = vsub.f32 %v1471, %v1487
      %v1504 = vsub.f32 %v1472, %v1488
      %v1505 = vsub.f32 %v1473, %v1489
      %v1506 = vsub.f32 %v1474, %v1490
      %v1507 = vsub.f32 %v1475, %v1491
      %v1508 = vsub.f32 %v1476, %v1492
      %v1509 = vsub.f32 %v1477, %v1493
      %v1510 = vsub.f32 %v1478, %v1494
      %v1511 = vsub.f32 %v1479, %v1495
      %v1512 = vsub.f32 %v1480, %v1496
      %v1513 = vadd.f32 %v1497, 1.0
      %v1514 = vadd.f32 %v1498, 1.0
      %v1515 = vadd.f32 %v1499, 1.0
      %v1516 = vadd.f32 %v1500, 1.0
      %v1517 = vadd.f32 %v1501, 1.0
      %v1518 = vadd.f32 %v1502, 1.0
      %v1519 = vadd.f32 %v1503, 1.0
      %v1520 = vadd.f32 %v1504, 1.0
      %v1521 = vadd.f32 %v1505, 1.0
      %v1522 = vadd.f32 %v1506, 1.0
      %v1523 = vadd.f32 %v1507, 1.0
      %v1524 = vadd.f32 %v1508, 1.0
      %v1525 = vadd.f32 %v1509, 1.0
      %v1526 = vadd.f32 %v1510, 1.0
      %v1527 = vadd.f32 %v1511, 1.0
      %v1528 = vadd.f32 %v1512, 1.0
      %v1529 = vmul.f32 %v1449, -0.75
      %v1530 = vmul.f32 %v1450, -0.75
      %v1531 = vmul.f32 %v1451, -0.75
      %v1532 = vmul.f32 %v1452, -0.75
      %v1533 = vmul.f32 %v1453, -0.75
      %v1534 = vmul.f32 %v1454, -0.75
      %v1535 = vmul.f32 %v1455, -0.75
      %v1536 = vmul.f32 %v1456, -0.75
      %v1537 = vmul.f32 %v1457, -0.75
      %v1538 = vmul.f32 %v1458, -0.75
      %v1539 = vmul.f32 %v1459, -0.75
      %v1540 = vmul.f32 %v1460, -0.75
      %v1541 = vmul.f32 %v1461, -0.75
      %v1542 = vmul.f32 %v1462, -0.75
      %v1543 = vmul.f32 %v1463, -0.75
      %v1544 = vmul.f32 %v1464, -0.75
      %v1545 = vmul.f32 %v1433, -3.75
      %v1546 = vmul.f32 %v1434, -3.75
      %v1547 = vmul.f32 %v1435, -3.75
      %v1548 = vmul.f32 %v1436, -3.75
      %v1549 = vmul.f32 %v1437, -3.75
      %v1550 = vmul.f32 %v1438, -3.75
      %v1551 = vmul.f32 %v1439, -3.75
      %v1552 = vmul.f32 %v1440, -3.75
      %v1553 = vmul.f32 %v1441, -3.75
      %v1554 = vmul.f32 %v1442, -3.75
      %v1555 = vmul.f32 %v1443, -3.75
      %v1556 = vmul.f32 %v1444, -3.75
      %v1557 = vmul.f32 %v1445, -3.75
      %v1558 = vmul.f32 %v1446, -3.75
      %v1559 = vmul.f32 %v1447, -3.75
      %v1560 = vmul.f32 %v1448, -3.75
      %v1561 = vsub.f32 %v1529, %v1545
      %v1562 = vsub.f32 %v1530, %v1546
      %v1563 = vsub.f32 %v1531, %v1547
      %v1564 = vsub.f32 %v1532, %v1548
      %v1565 = vsub.f32 %v1533, %v1549
      %v1566 = vsub.f32 %v1534, %v1550
      %v1567 = vsub.f32 %v1535, %v1551
      %v1568 = vsub.f32 %v1536, %v1552
      %v1569 = vsub.f32 %v1537, %v1553
      %v1570 = vsub.f32 %v1538, %v1554
      %v1571 = vsub.f32 %v1539, %v1555
      %v1572 = vsub.f32 %v1540, %v1556
      %v1573 = vsub.f32 %v1541, %v1557
      %v1574 = vsub.f32 %v1542, %v1558
      %v1575 = vsub.f32 %v1543, %v1559
      %v1576 = vsub.f32 %v1544, %v1560
      %v1577 = vmul.f32 %v1417, -6.0
      %v1578 = vmul.f32 %v1418, -6.0
      %v1579 = vmul.f32 %v1419, -6.0
      %v1580 = vmul.f32 %v1420, -6.0
      %v1581 = vmul.f32 %v1421, -6.0
      %v1582 = vmul.f32 %v1422, -6.0
      %v1583 = vmul.f32 %v1423, -6.0
      %v1584 = vmul.f32 %v1424, -6.0
      %v1585 = vmul.f32 %v1425, -6.0
      %v1586 = vmul.f32 %v1426, -6.0
      %v1587 = vmul.f32 %v1427, -6.0
      %v1588 = vmul.f32 %v1428, -6.0
      %v1589 = vmul.f32 %v1429, -6.0
      %v1590 = vmul.f32 %v1430, -6.0
      %v1591 = vmul.f32 %v1431, -6.0
      %v1592 = vmul.f32 %v1432, -6.0
      %v1593 = vadd.f32 %v1561, %v1577
      %v1594 = vadd.f32 %v1562, %v1578
      %v1595 = vadd.f32 %v1563, %v1579
      %v1596 = vadd.f32 %v1564, %v1580
      %v1597 = vadd.f32 %v1565, %v1581
      %v1598 = vadd.f32 %v1566, %v1582
      %v1599 = vadd.f32 %v1567, %v1583
      %v1600 = vadd.f32 %v1568, %v1584
      %v1601 = vadd.f32 %v1569, %v1585
      %v1602 = vadd.f32 %v1570, %v1586
      %v1603 = vadd.f32 %v1571, %v1587
      %v1604 = vadd.f32 %v1572, %v1588
      %v1605 = vadd.f32 %v1573, %v1589
      %v1606 = vadd.f32 %v1574, %v1590
      %v1607 = vadd.f32 %v1575, %v1591
      %v1608 = vadd.f32 %v1576, %v1592
      %v1609 = vsub.f32 %v1593, -3.0
      %v1610 = vsub.f32 %v1594, -3.0
      %v1611 = vsub.f32 %v1595, -3.0
      %v1612 = vsub.f32 %v1596, -3.0
      %v1613 = vsub.f32 %v1597, -3.0
      %v1614 = vsub.f32 %v1598, -3.0
      %v1615 = vsub.f32 %v1599, -3.0
      %v1616 = vsub.f32 %v1600, -3.0
      %v1617 = vsub.f32 %v1601, -3.0
      %v1618 = vsub.f32 %v1602, -3.0
      %v1619 = vsub.f32 %v1603, -3.0
      %v1620 = vsub.f32 %v1604, -3.0
      %v1621 = vsub.f32 %v1605, -3.0
      %v1622 = vsub.f32 %v1606, -3.0
      %v1623 = vsub.f32 %v1607, -3.0
      %v1624 = vsub.f32 %v1608, -3.0
      %vm1625 = vcmp.le.f32.partialorder %v1417, 1.0
      %vm1626 = vcmp.le.f32.partialorder %v1418, 1.0
      %vm1627 = vcmp.le.f32.partialorder %v1419, 1.0
      %vm1628 = vcmp.le.f32.partialorder %v1420, 1.0
      %vm1629 = vcmp.le.f32.partialorder %v1421, 1.0
      %vm1630 = vcmp.le.f32.partialorder %v1422, 1.0
      %vm1631 = vcmp.le.f32.partialorder %v1423, 1.0
      %vm1632 = vcmp.le.f32.partialorder %v1424, 1.0
      %vm1633 = vcmp.le.f32.partialorder %v1425, 1.0
      %vm1634 = vcmp.le.f32.partialorder %v1426, 1.0
      %vm1635 = vcmp.le.f32.partialorder %v1427, 1.0
      %vm1636 = vcmp.le.f32.partialorder %v1428, 1.0
      %vm1637 = vcmp.le.f32.partialorder %v1429, 1.0
      %vm1638 = vcmp.le.f32.partialorder %v1430, 1.0
      %vm1639 = vcmp.le.f32.partialorder %v1431, 1.0
      %vm1640 = vcmp.le.f32.partialorder %v1432, 1.0
      %vm1641 = vcmp.lt.f32.partialorder %v1417, 2.0
      %vm1642 = vcmp.lt.f32.partialorder %v1418, 2.0
      %vm1643 = vcmp.lt.f32.partialorder %v1419, 2.0
      %vm1644 = vcmp.lt.f32.partialorder %v1420, 2.0
      %vm1645 = vcmp.lt.f32.partialorder %v1421, 2.0
      %vm1646 = vcmp.lt.f32.partialorder %v1422, 2.0
      %vm1647 = vcmp.lt.f32.partialorder %v1423, 2.0
      %vm1648 = vcmp.lt.f32.partialorder %v1424, 2.0
      %vm1649 = vcmp.lt.f32.partialorder %v1425, 2.0
      %vm1650 = vcmp.lt.f32.partialorder %v1426, 2.0
      %vm1651 = vcmp.lt.f32.partialorder %v1427, 2.0
      %vm1652 = vcmp.lt.f32.partialorder %v1428, 2.0
      %vm1653 = vcmp.lt.f32.partialorder %v1429, 2.0
      %vm1654 = vcmp.lt.f32.partialorder %v1430, 2.0
      %vm1655 = vcmp.lt.f32.partialorder %v1431, 2.0
      %vm1656 = vcmp.lt.f32.partialorder %v1432, 2.0
      %v1657 = vsel %vm1641, %v1609, 0.0
      %v1658 = vsel %vm1642, %v1610, 0.0
      %v1659 = vsel %vm1643, %v1611, 0.0
      %v1660 = vsel %vm1644, %v1612, 0.0
      %v1661 = vsel %vm1645, %v1613, 0.0
      %v1662 = vsel %vm1646, %v1614, 0.0
      %v1663 = vsel %vm1647, %v1615, 0.0
      %v1664 = vsel %vm1648, %v1616, 0.0
      %v1665 = vsel %vm1649, %v1617, 0.0
      %v1666 = vsel %vm1650, %v1618, 0.0
      %v1667 = vsel %vm1651, %v1619, 0.0
      %v1668 = vsel %vm1652, %v1620, 0.0
      %v1669 = vsel %vm1653, %v1621, 0.0
      %v1670 = vsel %vm1654, %v1622, 0.0
      %v1671 = vsel %vm1655, %v1623, 0.0
      %v1672 = vsel %vm1656, %v1624, 0.0
      %v1673 = vsel %vm1625, %v1513, %v1657
      %v1674 = vsel %vm1626, %v1514, %v1658
      %v1675 = vsel %vm1627, %v1515, %v1659
      %v1676 = vsel %vm1628, %v1516, %v1660
      %v1677 = vsel %vm1629, %v1517, %v1661
      %v1678 = vsel %vm1630, %v1518, %v1662
      %v1679 = vsel %vm1631, %v1519, %v1663
      %v1680 = vsel %vm1632, %v1520, %v1664
      %v1681 = vsel %vm1633, %v1521, %v1665
      %v1682 = vsel %vm1634, %v1522, %v1666
      %v1683 = vsel %vm1635, %v1523, %v1667
      %v1684 = vsel %vm1636, %v1524, %v1668
      %v1685 = vsel %vm1637, %v1525, %v1669
      %v1686 = vsel %vm1638, %v1526, %v1670
      %v1687 = vsel %vm1639, %v1527, %v1671
      %v1688 = vsel %vm1640, %v1528, %v1672
      %v1689 = vmul.f32 %v1673, %v1274
      %v1690 = vmul.f32 %v1674, %v1277
      %v1691 = vmul.f32 %v1675, %v1280
      %v1692 = vmul.f32 %v1676, %v1283
      %v1693 = vmul.f32 %v1677, %v1286
      %v1694 = vmul.f32 %v1678, %v1289
      %v1695 = vmul.f32 %v1679, %v1292
      %v1696 = vmul.f32 %v1680, %v1295
      %v1697 = vmul.f32 %v1681, %v1298
      %v1698 = vmul.f32 %v1682, %v1301
      %v1699 = vmul.f32 %v1683, %v1304
      %v1700 = vmul.f32 %v1684, %v1307
      %v1701 = vmul.f32 %v1685, %v1310
      %v1702 = vmul.f32 %v1686, %v1313
      %v1703 = vmul.f32 %v1687, %v1316
      %v1704 = vmul.f32 %v1688, %v1319
      %v1705 = vsel %vm1207, %v1689, 0.0
      %1706 = vadd.xlane.f32.xlu0 %v1705
      %v1707 = vpop.xlane.xlu0 %1706
      %v1708 = vsel %vm1207, %v1690, 0.0
      %1709 = vadd.xlane.f32.xlu0 %v1708
      %v1710 = vpop.xlane.xlu0 %1709
      %v1711 = vsel %vm1207, %v1691, 0.0
      %1712 = vadd.xlane.f32.xlu0 %v1711
      %v1713 = vpop.xlane.xlu0 %1712
      %v1714 = vsel %vm1207, %v1692, 0.0
      %1715 = vadd.xlane.f32.xlu0 %v1714
      %v1716 = vpop.xlane.xlu0 %1715
      %v1717 = vsel %vm1207, %v1693, 0.0
      %1718 = vadd.xlane.f32.xlu0 %v1717
      %v1719 = vpop.xlane.xlu0 %1718
      %v1720 = vsel %vm1207, %v1694, 0.0
      %1721 = vadd.xlane.f32.xlu0 %v1720
      %v1722 = vpop.xlane.xlu0 %1721
      %v1723 = vsel %vm1207, %v1695, 0.0
      %1724 = vadd.xlane.f32.xlu0 %v1723
      %v1725 = vpop.xlane.xlu0 %1724
      %v1726 = vsel %vm1207, %v1696, 0.0
      %1727 = vadd.xlane.f32.xlu0 %v1726
      %v1728 = vpop.xlane.xlu0 %1727
      %v1729 = vsel %vm1207, %v1697, 0.0
      %1730 = vadd.xlane.f32.xlu0 %v1729
      %v1731 = vpop.xlane.xlu0 %1730
      %v1732 = vsel %vm1207, %v1698, 0.0
      %1733 = vadd.xlane.f32.xlu0 %v1732
      %v1734 = vpop.xlane.xlu0 %1733
      %v1735 = vsel %vm1207, %v1699, 0.0
      %1736 = vadd.xlane.f32.xlu0 %v1735
      %v1737 = vpop.xlane.xlu0 %1736
      %v1738 = vsel %vm1207, %v1700, 0.0
      %1739 = vadd.xlane.f32.xlu0 %v1738
      %v1740 = vpop.xlane.xlu0 %1739
      %v1741 = vsel %vm1207, %v1701, 0.0
      %1742 = vadd.xlane.f32.xlu0 %v1741
      %v1743 = vpop.xlane.xlu0 %1742
      %v1744 = vsel %vm1207, %v1702, 0.0
      %1745 = vadd.xlane.f32.xlu0 %v1744
      %v1746 = vpop.xlane.xlu0 %1745
      %v1747 = vsel %vm1207, %v1703, 0.0
      %1748 = vadd.xlane.f32.xlu0 %v1747
      %v1749 = vpop.xlane.xlu0 %1748
      %v1750 = vsel %vm1207, %v1704, 0.0
      %1751 = vadd.xlane.f32.xlu0 %v1750
      %v1752 = vpop.xlane.xlu0 %1751
      %1753 = vst.msk [vmem:[%s366] sm:$0xff] %vm721, %v1707
      %1754 = vst.msk [vmem:[%s366 + $0x8] sm:$0xff] %vm721, %v1710
      %1755 = vst.msk [vmem:[%s366 + $0x10] sm:$0xff] %vm721, %v1713
      %1756 = vst.msk [vmem:[%s366 + $0x18] sm:$0xff] %vm721, %v1716
      %1757 = vst.msk [vmem:[%s366 + $0x20] sm:$0xff] %vm721, %v1719
      %1758 = vst.msk [vmem:[%s366 + $0x28] sm:$0xff] %vm721, %v1722
      %1759 = vst.msk [vmem:[%s366 + $0x30] sm:$0xff] %vm721, %v1725
      %1760 = vst.msk [vmem:[%s366 + $0x38] sm:$0xff] %vm721, %v1728
      %1761 = vst.msk [vmem:[%s366 + $0x40] sm:$0xff] %vm721, %v1731
      %1762 = vst.msk [vmem:[%s366 + $0x48] sm:$0xff] %vm721, %v1734
      %1763 = vst.msk [vmem:[%s366 + $0x50] sm:$0xff] %vm721, %v1737
      %1764 = vst.msk [vmem:[%s366 + $0x58] sm:$0xff] %vm721, %v1740
      %1765 = vst.msk [vmem:[%s366 + $0x60] sm:$0xff] %vm721, %v1743
      %1766 = vst.msk [vmem:[%s366 + $0x68] sm:$0xff] %vm721, %v1746
      %1767 = vst.msk [vmem:[%s366 + $0x70] sm:$0xff] %vm721, %v1749
      %1768 = vst.msk [vmem:[%s366 + $0x78] sm:$0xff] %vm721, %v1752
      %s1769 = smul.u32 16, %s20
      %p1770 = scmp.lt.s32.totalorder %s1769, 31
      %s1771 = scalar_select %p1770, %s1769, 31
      %s1772 = smul.addr %s1771, 8
      %s1773 = scalar_lea.vmem %s6, %s1772
      %s1774 = smul.u32 16, %s20
      %p1775 = scmp.lt.s32.totalorder %s1774, 31
      %s1776 = scalar_select %p1775, %s1774, 31
      %s1777 = smul.addr %s1776, 8
      %s1778 = scalar_lea.vmem %s7, %s1777
      %s1779 = smul.u32 16, %s20
      %p1780 = scmp.lt.s32.totalorder %s1779, 31
      %s1781 = scalar_select %p1780, %s1779, 31
      %s1782 = smul.addr %s1781, 8
      %s1783 = scalar_lea.vmem %s8, %s1782
      // Predicated region
      $region45: #{tpu_custom_call.1} parent=43 // pred_check
        %p1784 = pneg %p179
      $region46: #{tpu_custom_call.1} parent=43 // pred_check_branch
        %1786 = sbr.rel (%p1784) target = $region48
      $region47: #{tpu_custom_call.1} parent=43 // pred_region
        %s1787 = smul.u32 16, %s20
      $region48: #{tpu_custom_call.1} parent=43 // pred_fallthru
        _
      // Predicated region
      $region49: #{tpu_custom_call.1} parent=43 // pred_check
        %p1788 = pneg %p205
      $region50: #{tpu_custom_call.1} parent=43 // pred_check_branch
        %1790 = sbr.rel (%p1788) target = $region52
      $region51: #{tpu_custom_call.1} parent=43 // pred_region
        %s1791 = smul.u32 16, %s20
      $region52: #{tpu_custom_call.1} parent=43 // pred_fallthru
        _
      // Predicated region
      $region53: #{tpu_custom_call.1} parent=43 // pred_check
        %p1792 = pneg %p231
      $region54: #{tpu_custom_call.1} parent=43 // pred_check_branch
        %1794 = sbr.rel (%p1792) target = $region56
      $region55: #{tpu_custom_call.1} parent=43 // pred_region
        %s1795 = smul.u32 16, %s20
      $region56: #{tpu_custom_call.1} parent=43 // pred_fallthru
        _
    $region44: #{tpu_custom_call.1} parent=5 // pred_fallthru
      _
    %p1796 = scmp.le.s32.totalorder 2, %s15
    // Predicated region
    $region57: #{tpu_custom_call.1} parent=5 // pred_check
      %p1797 = pneg %p1796
    $region58: #{tpu_custom_call.1} parent=5 // pred_check_branch
      %1799 = sbr.rel (%p1797) target = $region60
    $region59: #{tpu_custom_call.1} parent=5 // pred_region
      %s1800 = ssub.s32 %s15, 2
      // Predicated region
      $region61: #{tpu_custom_call.1} parent=59 // pred_check
        %p1801 = pneg %p185
      $region62: #{tpu_custom_call.1} parent=59 // pred_check_branch
        %1803 = sbr.rel (%p1801) target = $region64
      $region63: #{tpu_custom_call.1} parent=59 // pred_region
        %s1804 = smul.u32 16, %s21
        %p1805 = scmp.lt.s32.totalorder %s1804, 31
        %s1806 = scalar_select %p1805, %s1804, 31
        %s1807 = smul.addr %s1806, 8
        %s1808 = scalar_lea.vmem %s6, %s1807
      $region64: #{tpu_custom_call.1} parent=59 // pred_fallthru
        _
      // Predicated region
      $region65: #{tpu_custom_call.1} parent=59 // pred_check
        %p1809 = pneg %p211
      $region66: #{tpu_custom_call.1} parent=59 // pred_check_branch
        %1811 = sbr.rel (%p1809) target = $region68
      $region67: #{tpu_custom_call.1} parent=59 // pred_region
        %s1812 = smul.u32 16, %s21
        %p1813 = scmp.lt.s32.totalorder %s1812, 31
        %s1814 = scalar_select %p1813, %s1812, 31
        %s1815 = smul.addr %s1814, 8
        %s1816 = scalar_lea.vmem %s7, %s1815
      $region68: #{tpu_custom_call.1} parent=59 // pred_fallthru
        _
      // Predicated region
      $region69: #{tpu_custom_call.1} parent=59 // pred_check
        %p1817 = pneg %p237
      $region70: #{tpu_custom_call.1} parent=59 // pred_check_branch
        %1819 = sbr.rel (%p1817) target = $region72
      $region71: #{tpu_custom_call.1} parent=59 // pred_region
        %s1820 = smul.u32 16, %s21
        %p1821 = scmp.lt.s32.totalorder %s1820, 31
        %s1822 = scalar_select %p1821, %s1820, 31
        %s1823 = smul.addr %s1822, 8
        %s1824 = scalar_lea.vmem %s8, %s1823
      $region72: #{tpu_custom_call.1} parent=59 // pred_fallthru
        _
    $region60: #{tpu_custom_call.1} parent=5 // pred_fallthru
      _
  $region6: #{tpu_custom_call.1} parent=0 // loop_footer
    %s19 = sadd.s32 1, %s15
  $region7: #{tpu_custom_call.1} parent=0 // loop_footer_branch
    %14 = sbr.rel target = $region3
  $region8: #{tpu_custom_call.1} parent=0 // loop_exit
    _

</llo_original>
